<compile_context>
chip_gen: v7x
topology: tpu7x:2x2x1
jax: 0.10.0
libtpu: 0.0.40
codegen_flags: <defaults>
</compile_context>

<pallas_src>
import functools

import jax
import jax.numpy as jnp
from jax import lax
from jax.experimental import pallas as pl
from jax.experimental.pallas import tpu as pltpu

BN_EPS = 1e-5
NEG_SLOPE = 0.8


def _conv3x3_bn_lrelu(padflat_ref, pat_ref, w_ref, b_ref, g_ref, beta_ref,
                      mask, *, wp, length, m_valid, conv_dtype):
    """Conv2d(3x3, pad=1) + BatchNorm2d(train) + LeakyReLU(0.8), channel-major.

    padflat_ref : Ref[(Cin, FLAT)]  zero-padded input, channel-major, each
                  image flattened row-major as (H+2)*(W+2) (wp == W+2).
    pat_ref     : Ref[(9*Cin, length)] im2col scratch (conv_dtype).
    w_ref       : Ref[(Cout, 9*Cin)]  weights packed as (kh*3+kw)*Cin + cin.
    b/g/beta    : Ref[(Cout, 1)]
    mask        : (1, length) f32 validity mask over the shifted-view frame.
    Returns (Cout, length) f32; garbage (finite) values at invalid positions.
    """
    cin = padflat_ref.shape[0]

    # im2col: 9 lane-offset views of the padded flat buffer -> one (9*Cin, M')
    # VMEM buffer, so the whole 3x3 x Cin contraction is a single MXU matmul.
    for k in range(9):
        kh, kw = divmod(k, 3)
        s = kh * wp + kw
        pat_ref[k * cin:(k + 1) * cin, :] = (
            padflat_ref[:, s:s + length].astype(pat_ref.dtype))

    acc = jnp.dot(w_ref[...].astype(conv_dtype), pat_ref[...],
                  preferred_element_type=jnp.float32)            # (Cout, length)
    acc = acc + b_ref[...]

    # Train-mode BatchNorm over valid positions only.  Two-pass variance
    # (sum((x-mean)^2)) avoids the E[x^2]-mean^2 cancellation at scale.
    inv_m = 1.0 / float(m_valid)
    mean = jnp.sum(acc * mask, axis=1, keepdims=True) * inv_m    # (Cout, 1)
    diff = (acc - mean) * mask
    var = jnp.sum(diff * diff, axis=1, keepdims=True) * inv_m    # biased var
    scale = g_ref[...] * lax.rsqrt(var + BN_EPS)
    shift = beta_ref[...] - mean * scale

    y = acc * scale + shift                                      # lane-dense affine
    return jnp.where(y >= 0, y, NEG_SLOPE * y)                   # LeakyReLU(0.8)


def down_kernel(xflat_ref, mask_ref,
                w1_ref, b1_ref, g1_ref, be1_ref,
                w2_ref, b2_ref, g2_ref, be2_ref,
                out_ref, pat1_ref, ypad_ref, pat2_ref,
                *, n, h, w, ds, conv_dtype):
    wp = w + 2
    p_img = (h + 2) * wp                      # flattened padded image size
    length = (n - 1) * p_img + h * wp         # shifted-view length
    m_valid = n * h * w
    oh_n, ow_n = h // ds, w // ds
    cout = w2_ref.shape[0]

    mask = mask_ref[...]                                          # (1, length)

    # ---- conv block 1 (input already padded + flattened host-side) ----
    y1 = _conv3x3_bn_lrelu(xflat_ref, pat1_ref, w1_ref, b1_ref, g1_ref, be1_ref,
                           mask, wp=wp, length=length, m_valid=m_valid,
                           conv_dtype=conv_dtype)                 # (Cmid, length)

    # ---- re-pad conv1 output for conv block 2 (flat channel-major):
    #      one full zero store + one shifted interior store.  Valid view
    #      position i maps to padded position i + (wp+1); every pad position
    #      receives either the zero fill or a masked-to-zero value. ----
    ypad_ref[...] = jnp.zeros(ypad_ref.shape, ypad_ref.dtype)
    ypad_ref[:, wp + 1: wp + 1 + length] = y1 * mask

    # ---- conv block 2 ----
    y2 = _conv3x3_bn_lrelu(ypad_ref, pat2_ref, w2_ref, b2_ref, g2_ref, be2_ref,
                           mask, wp=wp, length=length, m_valid=m_valid,
                           conv_dtype=conv_dtype)                 # (Cout, length)

    # ---- MaxPool2d(ds), separable, directly on the flat channel-major layout.
    # W-direction window max: ds shifted lane slices + elementwise maximum.
    lw = length - (ds - 1)
    wmax = y2[:, 0:lw]
    for dw in range(1, ds):
        wmax = jnp.maximum(wmax, y2[:, dw:dw + lw])
    # H-direction window max: ds row-shifted slices (shift stride = wp).
    lh = lw - (ds - 1) * wp
    hmax = wmax[:, 0:lh]
    for dh in range(1, ds):
        hmax = jnp.maximum(hmax, wmax[:, dh * wp: dh * wp + lh])
    # hmax[:, n_i*p_img + oh*ds*wp + ow*ds] now holds the pooled value.

    # Extract the OW window maxima of every pooled output row with one small
    # selection matmul (avoids strided extraction / per-window loops).
    wrow = w - ds + 1
    wi = lax.broadcasted_iota(jnp.int32, (wrow, ow_n), 0)
    oi = lax.broadcasted_iota(jnp.int32, (wrow, ow_n), 1)
    sel = (wi == oi * ds).astype(jnp.float32)                     # (wrow, OW)

    rows = [hmax[:, n_i * p_img + oh * ds * wp:
                    n_i * p_img + oh * ds * wp + wrow]
            for n_i in range(n) for oh in range(oh_n)]            # (Cout, wrow) each
    allrows = jnp.stack(rows, axis=0).reshape(n * oh_n * cout, wrow)
    out_ref[...] = jnp.dot(allrows, sel,
                           preferred_element_type=jnp.float32
                           ).astype(out_ref.dtype)                # (N*OH*Cout, OW)


def down_pallas(x_nchw, params, downsample_factor=8, conv_dtype=jnp.float32):
    """Forward pass of `Down` (NCHW in, NCHW out).

    conv_dtype: pass jnp.bfloat16 at real UNet channel counts to use the fast
    MXU path and halve the im2col scratch; kept f32 at the toy shape so the
    check against the f32 reference stays tight (accumulation is f32 always).
    """
    w1, b1, g1, be1, w2, b2, g2, be2 = params
    N, Cin, H, W = x_nchw.shape
    Cmid, Cout = w1.shape[0], w2.shape[0]
    ds = downsample_factor
    assert H % ds == 0 and W % ds == 0, "spatial dims must be divisible by ds"
    OH, OW = H // ds, W // ds

    Wp = W + 2
    P = (H + 2) * Wp                   # flattened padded image size
    L = (N - 1) * P + H * Wp           # shifted-view length
    FLAT = N * P + Wp                  # zero tail keeps every view in-bounds

    # ---- host-side layout plumbing: channel-major, spatially padded, flat ----
    xpad = jnp.pad(x_nchw.astype(jnp.float32), ((0, 0), (0, 0), (1, 1), (1, 1)))
    xflat = jnp.transpose(xpad, (1, 0, 2, 3)).reshape(Cin, N * P)
    xflat = jnp.pad(xflat, ((0, 0), (0, FLAT - N * P)))           # (Cin, FLAT)

    idx = jnp.arange(L)
    r = idx % P
    mask = ((r < H * Wp) & (r % Wp < W)).astype(jnp.float32).reshape(1, L)

    def pack_w(wt):   # (Co, Ci, 3, 3) -> (Co, 9*Ci), row index (kh*3+kw)*Ci + ci
        co, ci = wt.shape[0], wt.shape[1]
        return jnp.transpose(wt, (0, 2, 3, 1)).reshape(co, 9 * ci).astype(jnp.float32)

    def pack_v(v):    # (C,) -> (C, 1)
        return v.reshape(-1, 1).astype(jnp.float32)

    kernel = functools.partial(down_kernel, n=N, h=H, w=W, ds=ds,
                               conv_dtype=conv_dtype)
    vmem = pl.BlockSpec(memory_space=pltpu.MemorySpace.VMEM)

    out_flat = pl.pallas_call(
        kernel,
        out_shape=jax.ShapeDtypeStruct((N * OH * Cout, OW), jnp.float32),
        in_specs=[vmem] * 10,
        out_specs=vmem,
        scratch_shapes=[
            pltpu.VMEM((9 * Cin, L), conv_dtype),    # im2col buffer, conv1
            pltpu.VMEM((Cmid, FLAT), jnp.float32),   # padded conv1 output (flat)
            pltpu.VMEM((9 * Cmid, L), conv_dtype),   # im2col buffer, conv2
        ],
        compiler_params=pltpu.CompilerParams(vmem_limit_bytes=64 * 1024 * 1024),
    )(xflat, mask,
      pack_w(w1), pack_v(b1), pack_v(g1), pack_v(be1),
      pack_w(w2), pack_v(b2), pack_v(g2), pack_v(be2))

    # (N*OH*Cout, OW) -> (N, Cout, OH, OW): pure host-side layout glue.
    return jnp.transpose(out_flat.reshape(N, OH, Cout, OW), (0, 2, 1, 3))


def init_params(key, cin, cmid, cout):
    """Deterministic synthetic init mimicking nn.Conv2d / nn.BatchNorm2d defaults."""
    ks = jax.random.split(key, 4)

    def conv_init(kw_, kb_, ci, co):
        bound = float(1.0 / (ci * 9) ** 0.5)
        w = jax.random.uniform(kw_, (co, ci, 3, 3), jnp.float32, -bound, bound)
        b = jax.random.uniform(kb_, (co,), jnp.float32, -bound, bound)
        return w, b

    w1, b1 = conv_init(ks[0], ks[1], cin, cmid)
    w2, b2 = conv_init(ks[2], ks[3], cmid, cout)
    g1 = jnp.ones((cmid,), jnp.float32)
    be1 = jnp.zeros((cmid,), jnp.float32)
    g2 = jnp.ones((cout,), jnp.float32)
    be2 = jnp.zeros((cout,), jnp.float32)
    return (w1, b1, g1, be1, w2, b2, g2, be2)


def down_reference(x, params, ds=8):
    """Pure-JAX reference with identical semantics (for validation)."""
    w1, b1, g1, be1, w2, b2, g2, be2 = params

    def block(x, w, b, g, be):
        y = lax.conv_general_dilated(
            x, w, (1, 1), ((1, 1), (1, 1)),
            dimension_numbers=('NCHW', 'OIHW', 'NCHW'))
        y = y + b[None, :, None, None]
        mean = jnp.mean(y, axis=(0, 2, 3), keepdims=True)
        var = jnp.mean((y - mean) ** 2, axis=(0, 2, 3), keepdims=True)
        y = (y - mean) * lax.rsqrt(var + BN_EPS)
        y = y * g[None, :, None, None] + be[None, :, None, None]
        return jnp.where(y >= 0, y, NEG_SLOPE * y)

    y = block(x, w1, b1, g1, be1)
    y = block(y, w2, b2, g2, be2)
    return lax.reduce_window(y, -jnp.inf, lax.max,
                             (1, 1, ds, ds), (1, 1, ds, ds), 'VALID')


if __name__ == "__main__":
    key = jax.random.PRNGKey(0)
    kx, kp = jax.random.split(key)

    N, Cin, H, W = 2, 4, 16, 16
    Cmid = Cout = 8
    ds = 8

    x = jax.random.normal(kx, (N, Cin, H, W), jnp.float32)
    params = init_params(kp, Cin, Cmid, Cout)

    out = down_pallas(x, params, ds)
    out = jax.block_until_ready(out)

    ref = down_reference(x, params, ds)
    assert out.shape == (N, Cout, H // ds, W // ds), out.shape
    max_err = float(jnp.max(jnp.abs(out - ref)))
    if not bool(jnp.allclose(out, ref, atol=2e-3, rtol=2e-3)):
        raise AssertionError(f"Pallas vs reference mismatch, max abs err = {max_err}")

    print("KERNEL_OK")
</pallas_src>

<mosaic_0001>
module attributes {stable_mosaic.version = 11 : i64} {
  func.func @down_kernel(%arg0: memref<4x666xf32, #tpu.memory_space<vmem>>, %arg1: memref<1x612xf32, #tpu.memory_space<vmem>>, %arg2: memref<8x36xf32, #tpu.memory_space<vmem>>, %arg3: memref<8x1xf32, #tpu.memory_space<vmem>>, %arg4: memref<8x1xf32, #tpu.memory_space<vmem>>, %arg5: memref<8x1xf32, #tpu.memory_space<vmem>>, %arg6: memref<8x72xf32, #tpu.memory_space<vmem>>, %arg7: memref<8x1xf32, #tpu.memory_space<vmem>>, %arg8: memref<8x1xf32, #tpu.memory_space<vmem>>, %arg9: memref<8x1xf32, #tpu.memory_space<vmem>>, %arg10: memref<32x2xf32, #tpu.memory_space<vmem>>, %arg11: memref<36x612xf32, #tpu.memory_space<vmem>>, %arg12: memref<8x666xf32, #tpu.memory_space<vmem>>, %arg13: memref<72x612xf32, #tpu.memory_space<vmem>>) attributes {dimension_semantics = [], scalar_prefetch = 0 : i64, scratch_operands = 3 : i64, tpu.core_type = #tpu.core_type<tc>} {
    %c0 = arith.constant 0 : index
    %c0_0 = arith.constant 0 : index
    %0 = vector.load %arg1[%c0, %c0_0] : memref<1x612xf32, #tpu.memory_space<vmem>>, vector<1x612xf32>
    %c0_1 = arith.constant 0 : index
    %c0_2 = arith.constant 0 : index
    %1 = vector.load %arg0[%c0_1, %c0_2] : memref<4x666xf32, #tpu.memory_space<vmem>>, vector<4x612xf32>
    %c0_3 = arith.constant 0 : index
    %c0_4 = arith.constant 0 : index
    %2 = vector.load %arg11[%c0_3, %c0_4] : memref<36x612xf32, #tpu.memory_space<vmem>>, vector<4x612xf32>
    tpu.vector_store %arg11[%c0_3, %c0_4], %1 {strides = array<i32>} : memref<36x612xf32, #tpu.memory_space<vmem>>, vector<4x612xf32>,
    %c0_5 = arith.constant 0 : index
    %c1 = arith.constant 1 : index
    %3 = vector.load %arg0[%c0_5, %c1] : memref<4x666xf32, #tpu.memory_space<vmem>>, vector<4x612xf32>
    %c4 = arith.constant 4 : index
    %c0_6 = arith.constant 0 : index
    %4 = vector.load %arg11[%c4, %c0_6] : memref<36x612xf32, #tpu.memory_space<vmem>>, vector<4x612xf32>
    tpu.vector_store %arg11[%c4, %c0_6], %3 {strides = array<i32>} : memref<36x612xf32, #tpu.memory_space<vmem>>, vector<4x612xf32>,
    %c0_7 = arith.constant 0 : index
    %c2 = arith.constant 2 : index
    %5 = vector.load %arg0[%c0_7, %c2] : memref<4x666xf32, #tpu.memory_space<vmem>>, vector<4x612xf32>
    %c8 = arith.constant 8 : index
    %c0_8 = arith.constant 0 : index
    %6 = vector.load %arg11[%c8, %c0_8] : memref<36x612xf32, #tpu.memory_space<vmem>>, vector<4x612xf32>
    tpu.vector_store %arg11[%c8, %c0_8], %5 {strides = array<i32>} : memref<36x612xf32, #tpu.memory_space<vmem>>, vector<4x612xf32>,
    %c0_9 = arith.constant 0 : index
    %c18 = arith.constant 18 : index
    %7 = vector.load %arg0[%c0_9, %c18] : memref<4x666xf32, #tpu.memory_space<vmem>>, vector<4x612xf32>
    %c12 = arith.constant 12 : index
    %c0_10 = arith.constant 0 : index
    %8 = vector.load %arg11[%c12, %c0_10] : memref<36x612xf32, #tpu.memory_space<vmem>>, vector<4x612xf32>
    tpu.vector_store %arg11[%c12, %c0_10], %7 {strides = array<i32>} : memref<36x612xf32, #tpu.memory_space<vmem>>, vector<4x612xf32>,
    %c0_11 = arith.constant 0 : index
    %c19 = arith.constant 19 : index
    %9 = vector.load %arg0[%c0_11, %c19] : memref<4x666xf32, #tpu.memory_space<vmem>>, vector<4x612xf32>
    %c16 = arith.constant 16 : index
    %c0_12 = arith.constant 0 : index
    %10 = vector.load %arg11[%c16, %c0_12] : memref<36x612xf32, #tpu.memory_space<vmem>>, vector<4x612xf32>
    tpu.vector_store %arg11[%c16, %c0_12], %9 {strides = array<i32>} : memref<36x612xf32, #tpu.memory_space<vmem>>, vector<4x612xf32>,
    %c0_13 = arith.constant 0 : index
    %c20 = arith.constant 20 : index
    %11 = vector.load %arg0[%c0_13, %c20] : memref<4x666xf32, #tpu.memory_space<vmem>>, vector<4x612xf32>
    %c20_14 = arith.constant 20 : index
    %c0_15 = arith.constant 0 : index
    %12 = vector.load %arg11[%c20_14, %c0_15] : memref<36x612xf32, #tpu.memory_space<vmem>>, vector<4x612xf32>
    tpu.vector_store %arg11[%c20_14, %c0_15], %11 {strides = array<i32>} : memref<36x612xf32, #tpu.memory_space<vmem>>, vector<4x612xf32>,
    %c0_16 = arith.constant 0 : index
    %c36 = arith.constant 36 : index
    %13 = vector.load %arg0[%c0_16, %c36] : memref<4x666xf32, #tpu.memory_space<vmem>>, vector<4x612xf32>
    %c24 = arith.constant 24 : index
    %c0_17 = arith.constant 0 : index
    %14 = vector.load %arg11[%c24, %c0_17] : memref<36x612xf32, #tpu.memory_space<vmem>>, vector<4x612xf32>
    tpu.vector_store %arg11[%c24, %c0_17], %13 {strides = array<i32>} : memref<36x612xf32, #tpu.memory_space<vmem>>, vector<4x612xf32>,
    %c0_18 = arith.constant 0 : index
    %c37 = arith.constant 37 : index
    %15 = vector.load %arg0[%c0_18, %c37] : memref<4x666xf32, #tpu.memory_space<vmem>>, vector<4x612xf32>
    %c28 = arith.constant 28 : index
    %c0_19 = arith.constant 0 : index
    %16 = vector.load %arg11[%c28, %c0_19] : memref<36x612xf32, #tpu.memory_space<vmem>>, vector<4x612xf32>
    tpu.vector_store %arg11[%c28, %c0_19], %15 {strides = array<i32>} : memref<36x612xf32, #tpu.memory_space<vmem>>, vector<4x612xf32>,
    %c0_20 = arith.constant 0 : index
    %c38 = arith.constant 38 : index
    %17 = vector.load %arg0[%c0_20, %c38] : memref<4x666xf32, #tpu.memory_space<vmem>>, vector<4x612xf32>
    %c32 = arith.constant 32 : index
    %c0_21 = arith.constant 0 : index
    %18 = vector.load %arg11[%c32, %c0_21] : memref<36x612xf32, #tpu.memory_space<vmem>>, vector<4x612xf32>
    tpu.vector_store %arg11[%c32, %c0_21], %17 {strides = array<i32>} : memref<36x612xf32, #tpu.memory_space<vmem>>, vector<4x612xf32>,
    %c0_22 = arith.constant 0 : index
    %c0_23 = arith.constant 0 : index
    %19 = vector.load %arg2[%c0_22, %c0_23] : memref<8x36xf32, #tpu.memory_space<vmem>>, vector<8x36xf32>
    %c0_24 = arith.constant 0 : index
    %c0_25 = arith.constant 0 : index
    %20 = vector.load %arg11[%c0_24, %c0_25] : memref<36x612xf32, #tpu.memory_space<vmem>>, vector<36x612xf32>
    %cst = arith.constant dense<0.000000e+00> : vector<8x612xf32>
    %21 = tpu.matmul %19, %20, %cst {dimension_numbers = #tpu.dot_dimension_numbers<[1], [0], [0], [1], [0, 0, 1, 1], [], []>} : vector<8x36xf32>, vector<36x612xf32>, vector<8x612xf32> -> vector<8x612xf32>
    %c0_26 = arith.constant 0 : index
    %c0_27 = arith.constant 0 : index
    %22 = vector.load %arg3[%c0_26, %c0_27] : memref<8x1xf32, #tpu.memory_space<vmem>>, vector<8x1xf32>
    %23 = vector.broadcast %22 : vector<8x1xf32> to vector<8x612xf32>
    %24 = arith.addf %21, %23 : vector<8x612xf32>
    %25 = vector.broadcast %0 : vector<1x612xf32> to vector<8x612xf32>
    %26 = arith.mulf %24, %25 : vector<8x612xf32>
    %cst_28 = arith.constant dense<0.000000e+00> : vector<8xf32>
    %27 = vector.multi_reduction <add>, %26, %cst_28 [1] : vector<8x612xf32> to vector<8xf32>
    %28 = vector.shape_cast %27 : vector<8xf32> to vector<8x1xf32>
    %cst_29 = arith.constant 0.001953125 : f32
    %29 = vector.broadcast %cst_29 : f32 to vector<8x1xf32>
    %30 = arith.mulf %28, %29 : vector<8x1xf32>
    %31 = vector.broadcast %30 : vector<8x1xf32> to vector<8x612xf32>
    %32 = arith.subf %24, %31 : vector<8x612xf32>
    %33 = vector.broadcast %0 : vector<1x612xf32> to vector<8x612xf32>
    %34 = arith.mulf %32, %33 : vector<8x612xf32>
    %35 = arith.mulf %34, %34 : vector<8x612xf32>
    %cst_30 = arith.constant dense<0.000000e+00> : vector<8xf32>
    %36 = vector.multi_reduction <add>, %35, %cst_30 [1] : vector<8x612xf32> to vector<8xf32>
    %37 = vector.shape_cast %36 : vector<8xf32> to vector<8x1xf32>
    %cst_31 = arith.constant 0.001953125 : f32
    %38 = vector.broadcast %cst_31 : f32 to vector<8x1xf32>
    %39 = arith.mulf %37, %38 : vector<8x1xf32>
    %c0_32 = arith.constant 0 : index
    %c0_33 = arith.constant 0 : index
    %40 = vector.load %arg4[%c0_32, %c0_33] : memref<8x1xf32, #tpu.memory_space<vmem>>, vector<8x1xf32>
    %cst_34 = arith.constant 9.99999974E-6 : f32
    %41 = vector.broadcast %cst_34 : f32 to vector<8x1xf32>
    %42 = arith.addf %39, %41 : vector<8x1xf32>
    %43 = math.rsqrt %42 : vector<8x1xf32>
    %44 = arith.mulf %40, %43 : vector<8x1xf32>
    %c0_35 = arith.constant 0 : index
    %c0_36 = arith.constant 0 : index
    %45 = vector.load %arg5[%c0_35, %c0_36] : memref<8x1xf32, #tpu.memory_space<vmem>>, vector<8x1xf32>
    %46 = arith.mulf %30, %44 : vector<8x1xf32>
    %47 = arith.subf %45, %46 : vector<8x1xf32>
    %48 = vector.broadcast %44 : vector<8x1xf32> to vector<8x612xf32>
    %49 = arith.mulf %24, %48 : vector<8x612xf32>
    %50 = vector.broadcast %47 : vector<8x1xf32> to vector<8x612xf32>
    %51 = arith.addf %49, %50 : vector<8x612xf32>
    %cst_37 = arith.constant 0.000000e+00 : f32
    %52 = vector.broadcast %cst_37 : f32 to vector<8x612xf32>
    %53 = arith.cmpf oge, %51, %52 : vector<8x612xf32>
    %cst_38 = arith.constant 8.000000e-01 : f32
    %54 = vector.broadcast %cst_38 : f32 to vector<8x612xf32>
    %55 = arith.mulf %54, %51 : vector<8x612xf32>
    %56 = arith.select %53, %51, %55 : vector<8x612xi1>, vector<8x612xf32>
    %cst_39 = arith.constant 0.000000e+00 : f32
    %57 = vector.broadcast %cst_39 : f32 to vector<8x666xf32>
    %c0_40 = arith.constant 0 : index
    %c0_41 = arith.constant 0 : index
    %58 = vector.load %arg12[%c0_40, %c0_41] : memref<8x666xf32, #tpu.memory_space<vmem>>, vector<8x666xf32>
    tpu.vector_store %arg12[%c0_40, %c0_41], %57 {strides = array<i32>} : memref<8x666xf32, #tpu.memory_space<vmem>>, vector<8x666xf32>,
    %59 = vector.broadcast %0 : vector<1x612xf32> to vector<8x612xf32>
    %60 = arith.mulf %56, %59 : vector<8x612xf32>
    %c0_42 = arith.constant 0 : index
    %c19_43 = arith.constant 19 : index
    %61 = vector.load %arg12[%c0_42, %c19_43] : memref<8x666xf32, #tpu.memory_space<vmem>>, vector<8x612xf32>
    tpu.vector_store %arg12[%c0_42, %c19_43], %60 {strides = array<i32>} : memref<8x666xf32, #tpu.memory_space<vmem>>, vector<8x612xf32>,
    %c0_44 = arith.constant 0 : index
    %c0_45 = arith.constant 0 : index
    %62 = vector.load %arg12[%c0_44, %c0_45] : memref<8x666xf32, #tpu.memory_space<vmem>>, vector<8x612xf32>
    %c0_46 = arith.constant 0 : index
    %c0_47 = arith.constant 0 : index
    %63 = vector.load %arg13[%c0_46, %c0_47] : memref<72x612xf32, #tpu.memory_space<vmem>>, vector<8x612xf32>
    tpu.vector_store %arg13[%c0_46, %c0_47], %62 {strides = array<i32>} : memref<72x612xf32, #tpu.memory_space<vmem>>, vector<8x612xf32>,
    %c0_48 = arith.constant 0 : index
    %c1_49 = arith.constant 1 : index
    %64 = vector.load %arg12[%c0_48, %c1_49] : memref<8x666xf32, #tpu.memory_space<vmem>>, vector<8x612xf32>
    %c8_50 = arith.constant 8 : index
    %c0_51 = arith.constant 0 : index
    %65 = vector.load %arg13[%c8_50, %c0_51] : memref<72x612xf32, #tpu.memory_space<vmem>>, vector<8x612xf32>
    tpu.vector_store %arg13[%c8_50, %c0_51], %64 {strides = array<i32>} : memref<72x612xf32, #tpu.memory_space<vmem>>, vector<8x612xf32>,
    %c0_52 = arith.constant 0 : index
    %c2_53 = arith.constant 2 : index
    %66 = vector.load %arg12[%c0_52, %c2_53] : memref<8x666xf32, #tpu.memory_space<vmem>>, vector<8x612xf32>
    %c16_54 = arith.constant 16 : index
    %c0_55 = arith.constant 0 : index
    %67 = vector.load %arg13[%c16_54, %c0_55] : memref<72x612xf32, #tpu.memory_space<vmem>>, vector<8x612xf32>
    tpu.vector_store %arg13[%c16_54, %c0_55], %66 {strides = array<i32>} : memref<72x612xf32, #tpu.memory_space<vmem>>, vector<8x612xf32>,
    %c0_56 = arith.constant 0 : index
    %c18_57 = arith.constant 18 : index
    %68 = vector.load %arg12[%c0_56, %c18_57] : memref<8x666xf32, #tpu.memory_space<vmem>>, vector<8x612xf32>
    %c24_58 = arith.constant 24 : index
    %c0_59 = arith.constant 0 : index
    %69 = vector.load %arg13[%c24_58, %c0_59] : memref<72x612xf32, #tpu.memory_space<vmem>>, vector<8x612xf32>
    tpu.vector_store %arg13[%c24_58, %c0_59], %68 {strides = array<i32>} : memref<72x612xf32, #tpu.memory_space<vmem>>, vector<8x612xf32>,
    %c0_60 = arith.constant 0 : index
    %c19_61 = arith.constant 19 : index
    %70 = vector.load %arg12[%c0_60, %c19_61] : memref<8x666xf32, #tpu.memory_space<vmem>>, vector<8x612xf32>
    %c32_62 = arith.constant 32 : index
    %c0_63 = arith.constant 0 : index
    %71 = vector.load %arg13[%c32_62, %c0_63] : memref<72x612xf32, #tpu.memory_space<vmem>>, vector<8x612xf32>
    tpu.vector_store %arg13[%c32_62, %c0_63], %70 {strides = array<i32>} : memref<72x612xf32, #tpu.memory_space<vmem>>, vector<8x612xf32>,
    %c0_64 = arith.constant 0 : index
    %c20_65 = arith.constant 20 : index
    %72 = vector.load %arg12[%c0_64, %c20_65] : memref<8x666xf32, #tpu.memory_space<vmem>>, vector<8x612xf32>
    %c40 = arith.constant 40 : index
    %c0_66 = arith.constant 0 : index
    %73 = vector.load %arg13[%c40, %c0_66] : memref<72x612xf32, #tpu.memory_space<vmem>>, vector<8x612xf32>
    tpu.vector_store %arg13[%c40, %c0_66], %72 {strides = array<i32>} : memref<72x612xf32, #tpu.memory_space<vmem>>, vector<8x612xf32>,
    %c0_67 = arith.constant 0 : index
    %c36_68 = arith.constant 36 : index
    %74 = vector.load %arg12[%c0_67, %c36_68] : memref<8x666xf32, #tpu.memory_space<vmem>>, vector<8x612xf32>
    %c48 = arith.constant 48 : index
    %c0_69 = arith.constant 0 : index
    %75 = vector.load %arg13[%c48, %c0_69] : memref<72x612xf32, #tpu.memory_space<vmem>>, vector<8x612xf32>
    tpu.vector_store %arg13[%c48, %c0_69], %74 {strides = array<i32>} : memref<72x612xf32, #tpu.memory_space<vmem>>, vector<8x612xf32>,
    %c0_70 = arith.constant 0 : index
    %c37_71 = arith.constant 37 : index
    %76 = vector.load %arg12[%c0_70, %c37_71] : memref<8x666xf32, #tpu.memory_space<vmem>>, vector<8x612xf32>
    %c56 = arith.constant 56 : index
    %c0_72 = arith.constant 0 : index
    %77 = vector.load %arg13[%c56, %c0_72] : memref<72x612xf32, #tpu.memory_space<vmem>>, vector<8x612xf32>
    tpu.vector_store %arg13[%c56, %c0_72], %76 {strides = array<i32>} : memref<72x612xf32, #tpu.memory_space<vmem>>, vector<8x612xf32>,
    %c0_73 = arith.constant 0 : index
    %c38_74 = arith.constant 38 : index
    %78 = vector.load %arg12[%c0_73, %c38_74] : memref<8x666xf32, #tpu.memory_space<vmem>>, vector<8x612xf32>
    %c64 = arith.constant 64 : index
    %c0_75 = arith.constant 0 : index
    %79 = vector.load %arg13[%c64, %c0_75] : memref<72x612xf32, #tpu.memory_space<vmem>>, vector<8x612xf32>
    tpu.vector_store %arg13[%c64, %c0_75], %78 {strides = array<i32>} : memref<72x612xf32, #tpu.memory_space<vmem>>, vector<8x612xf32>,
    %c0_76 = arith.constant 0 : index
    %c0_77 = arith.constant 0 : index
    %80 = vector.load %arg6[%c0_76, %c0_77] : memref<8x72xf32, #tpu.memory_space<vmem>>, vector<8x72xf32>
    %c0_78 = arith.constant 0 : index
    %c0_79 = arith.constant 0 : index
    %81 = vector.load %arg13[%c0_78, %c0_79] : memref<72x612xf32, #tpu.memory_space<vmem>>, vector<72x612xf32>
    %cst_80 = arith.constant dense<0.000000e+00> : vector<8x612xf32>
    %82 = tpu.matmul %80, %81, %cst_80 {dimension_numbers = #tpu.dot_dimension_numbers<[1], [0], [0], [1], [0, 0, 1, 1], [], []>} : vector<8x72xf32>, vector<72x612xf32>, vector<8x612xf32> -> vector<8x612xf32>
    %c0_81 = arith.constant 0 : index
    %c0_82 = arith.constant 0 : index
    %83 = vector.load %arg7[%c0_81, %c0_82] : memref<8x1xf32, #tpu.memory_space<vmem>>, vector<8x1xf32>
    %84 = vector.broadcast %83 : vector<8x1xf32> to vector<8x612xf32>
    %85 = arith.addf %82, %84 : vector<8x612xf32>
    %86 = vector.broadcast %0 : vector<1x612xf32> to vector<8x612xf32>
    %87 = arith.mulf %85, %86 : vector<8x612xf32>
    %cst_83 = arith.constant dense<0.000000e+00> : vector<8xf32>
    %88 = vector.multi_reduction <add>, %87, %cst_83 [1] : vector<8x612xf32> to vector<8xf32>
    %89 = vector.shape_cast %88 : vector<8xf32> to vector<8x1xf32>
    %cst_84 = arith.constant 0.001953125 : f32
    %90 = vector.broadcast %cst_84 : f32 to vector<8x1xf32>
    %91 = arith.mulf %89, %90 : vector<8x1xf32>
    %92 = vector.broadcast %91 : vector<8x1xf32> to vector<8x612xf32>
    %93 = arith.subf %85, %92 : vector<8x612xf32>
    %94 = vector.broadcast %0 : vector<1x612xf32> to vector<8x612xf32>
    %95 = arith.mulf %93, %94 : vector<8x612xf32>
    %96 = arith.mulf %95, %95 : vector<8x612xf32>
    %cst_85 = arith.constant dense<0.000000e+00> : vector<8xf32>
    %97 = vector.multi_reduction <add>, %96, %cst_85 [1] : vector<8x612xf32> to vector<8xf32>
    %98 = vector.shape_cast %97 : vector<8xf32> to vector<8x1xf32>
    %cst_86 = arith.constant 0.001953125 : f32
    %99 = vector.broadcast %cst_86 : f32 to vector<8x1xf32>
    %100 = arith.mulf %98, %99 : vector<8x1xf32>
    %c0_87 = arith.constant 0 : index
    %c0_88 = arith.constant 0 : index
    %101 = vector.load %arg8[%c0_87, %c0_88] : memref<8x1xf32, #tpu.memory_space<vmem>>, vector<8x1xf32>
    %cst_89 = arith.constant 9.99999974E-6 : f32
    %102 = vector.broadcast %cst_89 : f32 to vector<8x1xf32>
    %103 = arith.addf %100, %102 : vector<8x1xf32>
    %104 = math.rsqrt %103 : vector<8x1xf32>
    %105 = arith.mulf %101, %104 : vector<8x1xf32>
    %c0_90 = arith.constant 0 : index
    %c0_91 = arith.constant 0 : index
    %106 = vector.load %arg9[%c0_90, %c0_91] : memref<8x1xf32, #tpu.memory_space<vmem>>, vector<8x1xf32>
    %107 = arith.mulf %91, %105 : vector<8x1xf32>
    %108 = arith.subf %106, %107 : vector<8x1xf32>
    %109 = vector.broadcast %105 : vector<8x1xf32> to vector<8x612xf32>
    %110 = arith.mulf %85, %109 : vector<8x612xf32>
    %111 = vector.broadcast %108 : vector<8x1xf32> to vector<8x612xf32>
    %112 = arith.addf %110, %111 : vector<8x612xf32>
    %cst_92 = arith.constant 0.000000e+00 : f32
    %113 = vector.broadcast %cst_92 : f32 to vector<8x612xf32>
    %114 = arith.cmpf oge, %112, %113 : vector<8x612xf32>
    %cst_93 = arith.constant 8.000000e-01 : f32
    %115 = vector.broadcast %cst_93 : f32 to vector<8x612xf32>
    %116 = arith.mulf %115, %112 : vector<8x612xf32>
    %117 = arith.select %114, %112, %116 : vector<8x612xi1>, vector<8x612xf32>
    %118 = vector.extract_strided_slice %117 {offsets = [0, 0], sizes = [8, 605], strides = [1, 1]} : vector<8x612xf32> to vector<8x605xf32>
    %119 = vector.extract_strided_slice %117 {offsets = [0, 1], sizes = [8, 605], strides = [1, 1]} : vector<8x612xf32> to vector<8x605xf32>
    %120 = arith.maximumf %118, %119 : vector<8x605xf32>
    %121 = vector.extract_strided_slice %117 {offsets = [0, 2], sizes = [8, 605], strides = [1, 1]} : vector<8x612xf32> to vector<8x605xf32>
    %122 = arith.maximumf %120, %121 : vector<8x605xf32>
    %123 = vector.extract_strided_slice %117 {offsets = [0, 3], sizes = [8, 605], strides = [1, 1]} : vector<8x612xf32> to vector<8x605xf32>
    %124 = arith.maximumf %122, %123 : vector<8x605xf32>
    %125 = vector.extract_strided_slice %117 {offsets = [0, 4], sizes = [8, 605], strides = [1, 1]} : vector<8x612xf32> to vector<8x605xf32>
    %126 = arith.maximumf %124, %125 : vector<8x605xf32>
    %127 = vector.extract_strided_slice %117 {offsets = [0, 5], sizes = [8, 605], strides = [1, 1]} : vector<8x612xf32> to vector<8x605xf32>
    %128 = arith.maximumf %126, %127 : vector<8x605xf32>
    %129 = vector.extract_strided_slice %117 {offsets = [0, 6], sizes = [8, 605], strides = [1, 1]} : vector<8x612xf32> to vector<8x605xf32>
    %130 = arith.maximumf %128, %129 : vector<8x605xf32>
    %131 = vector.extract_strided_slice %117 {offsets = [0, 7], sizes = [8, 605], strides = [1, 1]} : vector<8x612xf32> to vector<8x605xf32>
    %132 = arith.maximumf %130, %131 : vector<8x605xf32>
    %133 = vector.extract_strided_slice %132 {offsets = [0, 0], sizes = [8, 479], strides = [1, 1]} : vector<8x605xf32> to vector<8x479xf32>
    %134 = vector.extract_strided_slice %132 {offsets = [0, 18], sizes = [8, 479], strides = [1, 1]} : vector<8x605xf32> to vector<8x479xf32>
    %135 = arith.maximumf %133, %134 : vector<8x479xf32>
    %136 = vector.extract_strided_slice %132 {offsets = [0, 36], sizes = [8, 479], strides = [1, 1]} : vector<8x605xf32> to vector<8x479xf32>
    %137 = arith.maximumf %135, %136 : vector<8x479xf32>
    %138 = vector.extract_strided_slice %132 {offsets = [0, 54], sizes = [8, 479], strides = [1, 1]} : vector<8x605xf32> to vector<8x479xf32>
    %139 = arith.maximumf %137, %138 : vector<8x479xf32>
    %140 = vector.extract_strided_slice %132 {offsets = [0, 72], sizes = [8, 479], strides = [1, 1]} : vector<8x605xf32> to vector<8x479xf32>
    %141 = arith.maximumf %139, %140 : vector<8x479xf32>
    %142 = vector.extract_strided_slice %132 {offsets = [0, 90], sizes = [8, 479], strides = [1, 1]} : vector<8x605xf32> to vector<8x479xf32>
    %143 = arith.maximumf %141, %142 : vector<8x479xf32>
    %144 = vector.extract_strided_slice %132 {offsets = [0, 108], sizes = [8, 479], strides = [1, 1]} : vector<8x605xf32> to vector<8x479xf32>
    %145 = arith.maximumf %143, %144 : vector<8x479xf32>
    %146 = vector.extract_strided_slice %132 {offsets = [0, 126], sizes = [8, 479], strides = [1, 1]} : vector<8x605xf32> to vector<8x479xf32>
    %147 = arith.maximumf %145, %146 : vector<8x479xf32>
    %148 = tpu.iota {dimensions = array<i32: 0>} : vector<9x2xi32>
    %149 = tpu.iota {dimensions = array<i32: 1>} : vector<9x2xi32>
    %c8_i32 = arith.constant 8 : i32
    %150 = vector.broadcast %c8_i32 : i32 to vector<9x2xi32>
    %151 = arith.muli %149, %150 : vector<9x2xi32>
    %152 = arith.cmpi eq, %148, %151 : vector<9x2xi32>
    %153 = arith.extui %152 : vector<9x2xi1> to vector<9x2xi32>
    %154 = arith.sitofp %153 : vector<9x2xi32> to vector<9x2xf32>
    %155 = vector.extract_strided_slice %147 {offsets = [0, 0], sizes = [8, 9], strides = [1, 1]} : vector<8x479xf32> to vector<8x9xf32>
    %156 = vector.extract_strided_slice %147 {offsets = [0, 144], sizes = [8, 9], strides = [1, 1]} : vector<8x479xf32> to vector<8x9xf32>
    %157 = vector.extract_strided_slice %147 {offsets = [0, 324], sizes = [8, 9], strides = [1, 1]} : vector<8x479xf32> to vector<8x9xf32>
    %158 = vector.extract_strided_slice %147 {offsets = [0, 468], sizes = [8, 9], strides = [1, 1]} : vector<8x479xf32> to vector<8x9xf32>
    %159 = vector.shape_cast %155 : vector<8x9xf32> to vector<1x8x9xf32>
    %160 = vector.shape_cast %156 : vector<8x9xf32> to vector<1x8x9xf32>
    %161 = vector.shape_cast %157 : vector<8x9xf32> to vector<1x8x9xf32>
    %162 = vector.shape_cast %158 : vector<8x9xf32> to vector<1x8x9xf32>
    %163 = tpu.concatenate %159, %160, %161, %162 in 0 : vector<1x8x9xf32>, vector<1x8x9xf32>, vector<1x8x9xf32>, vector<1x8x9xf32> -> vector<4x8x9xf32>
    %164 = vector.shape_cast %163 : vector<4x8x9xf32> to vector<32x9xf32>
    %cst_94 = arith.constant dense<0.000000e+00> : vector<32x2xf32>
    %165 = tpu.matmul %164, %154, %cst_94 {dimension_numbers = #tpu.dot_dimension_numbers<[1], [0], [0], [1], [0, 0, 1, 1], [], []>} : vector<32x9xf32>, vector<9x2xf32>, vector<32x2xf32> -> vector<32x2xf32>
    %c0_95 = arith.constant 0 : index
    %c0_96 = arith.constant 0 : index
    %166 = vector.load %arg10[%c0_95, %c0_96] : memref<32x2xf32, #tpu.memory_space<vmem>>, vector<32x2xf32>
    tpu.vector_store %arg10[%c0_95, %c0_96], %165 {strides = array<i32>} : memref<32x2xf32, #tpu.memory_space<vmem>>, vector<32x2xf32>,
    return
  }
}

</mosaic_0001>

<llo_original>
// kernel: tpu_custom_call.1
$region0: #{tpu_custom_call.1}
  #allocation0 [shape = 'u32[]', space=smem, size = 0x4, offset = 0x4, fixed_abs, tag = 'smem constant byte address 0x4 - core index']
  #allocation1 [shape = 'u32[144,128]{1,0:T(1,128)}', space=vmem, size = 0x12000, scoped, tag = 'internal scratch']
  #allocation2 [shape = 'f32[36,612]{1,0:T(8,128)}', space=vmem, size = 0x19000, scoped, tag = 'scratch operand']
  #allocation3 [shape = 'f32[8,666]{1,0:T(8,128)}', space=vmem, size = 0x6000, scoped, tag = 'scratch operand']
  #allocation4 [shape = 'f32[72,612]{1,0:T(8,128)}', space=vmem, size = 0x2d000, scoped, tag = 'scratch operand']
  %s0 = inlined_call_operand.hbm [shape: f32[4,666], index: 0, kind: input, shape index: {}]
  %s1 = inlined_call_operand.hbm [shape: f32[1,612], index: 1, kind: input, shape index: {}]
  %s2 = inlined_call_operand.hbm [shape: f32[8,36], index: 2, kind: input, shape index: {}]
  %s3 = inlined_call_operand.hbm [shape: f32[8,1], index: 3, kind: input, shape index: {}]
  %s4 = inlined_call_operand.hbm [shape: f32[8,1], index: 4, kind: input, shape index: {}]
  %s5 = inlined_call_operand.hbm [shape: f32[8,1], index: 5, kind: input, shape index: {}]
  %s6 = inlined_call_operand.hbm [shape: f32[8,72], index: 6, kind: input, shape index: {}]
  %s7 = inlined_call_operand.hbm [shape: f32[8,1], index: 7, kind: input, shape index: {}]
  %s8 = inlined_call_operand.hbm [shape: f32[8,1], index: 8, kind: input, shape index: {}]
  %s9 = inlined_call_operand.hbm [shape: f32[8,1], index: 9, kind: input, shape index: {}]
  %s10 = inlined_call_operand.hbm [shape: f32[32,2], index: 10, kind: output, shape index: {}]
  %s11 = sld [smem:[#allocation0]]
  $region90: #{tpu_custom_call.1} parent=0
    _
  %s13 = ssub.s32 1, %s11
  %s14 = scalar_select 0, %s13, %s11
  $region1: #{tpu_custom_call.1} parent=0
    #allocation5 [shape = 'u8[12288]{0}', space=vmem, size = 0x3000, scoped, tag = 'input window, operand 0, single buffered']
    #allocation6 [shape = 's32[1]{0}', space=sflag, size = 0x4, scoped, tag = 'scoped memory for tpu_custom_call.1']
    #allocation7 [shape = 's32[1]{0}', space=sflag, size = 0x4, scoped, tag = 'scoped memory for tpu_custom_call.1']
    #allocation8 [shape = 'u8[2560]{0}', space=vmem, size = 0xc00, scoped, tag = 'input window, operand 1, single buffered']
    #allocation9 [shape = 's32[1]{0}', space=sflag, size = 0x4, scoped, tag = 'scoped memory for tpu_custom_call.1']
    #allocation10 [shape = 'u8[4096]{0}', space=vmem, size = 0x1000, scoped, tag = 'input window, operand 2, single buffered']
    #allocation11 [shape = 'u8[4096]{0}', space=vmem, size = 0x1000, scoped, tag = 'input window, operand 3, single buffered']
    #allocation12 [shape = 's32[1]{0}', space=sflag, size = 0x4, scoped, tag = 'scoped memory for tpu_custom_call.1']
    #allocation13 [shape = 'u8[4096]{0}', space=vmem, size = 0x1000, scoped, tag = 'input window, operand 4, single buffered']
    #allocation14 [shape = 'u8[4096]{0}', space=vmem, size = 0x1000, scoped, tag = 'input window, operand 5, single buffered']
    #allocation15 [shape = 's32[1]{0}', space=sflag, size = 0x4, scoped, tag = 'scoped memory for tpu_custom_call.1']
    #allocation16 [shape = 'u8[4096]{0}', space=vmem, size = 0x1000, scoped, tag = 'input window, operand 6, single buffered']
    #allocation17 [shape = 'u8[4096]{0}', space=vmem, size = 0x1000, scoped, tag = 'input window, operand 7, single buffered']
    #allocation18 [shape = 's32[1]{0}', space=sflag, size = 0x4, scoped, tag = 'scoped memory for tpu_custom_call.1']
    #allocation19 [shape = 'u8[4096]{0}', space=vmem, size = 0x1000, scoped, tag = 'input window, operand 8, single buffered']
    #allocation20 [shape = 'u8[4096]{0}', space=vmem, size = 0x1000, scoped, tag = 'input window, operand 9, single buffered']
    #allocation21 [shape = 's32[1]{0}', space=sflag, size = 0x4, scoped, tag = 'scoped memory for tpu_custom_call.1']
    #allocation22 [shape = 'u8[16384]{0}', space=vmem, size = 0x4000, scoped, tag = 'output window, operand 0, single buffered']
    %15 = vsyncpa [#allocation6], 0
    %16 = vsyncpa [#allocation9], 0
    %17 = vsyncpa [#allocation12], 0
    %18 = vsyncpa [#allocation15], 0
    %19 = vsyncpa [#allocation18], 0
    %20 = vsyncpa [#allocation21], 0
    %21 = vsyncpa [#allocation7], 0
    // Predicated region
    $region2: #{tpu_custom_call.1} parent=1 // pred_check
      _
    $region3: #{tpu_custom_call.1} parent=1 // pred_check_branch
      %23 = sbr.rel (0) target = $region5
    $region4: #{tpu_custom_call.1} parent=1 // pred_region
      %s25 = ssub.s32 384, 384
      %26 = vsyncadd [#allocation6], %s25
      %s28 = sshll.u32 [#allocation5], 4
      %s29 = int_to_ptr.vmem [resolvable:$true] %s28
      %31 = dma.hbm_to_vmem [thread:$0]  %s0, 384, %s29, [#allocation6]
    $region5: #{tpu_custom_call.1} parent=1 // pred_fallthru
      _
    // Predicated region
    $region6: #{tpu_custom_call.1} parent=1 // pred_check
      _
    $region7: #{tpu_custom_call.1} parent=1 // pred_check_branch
      %33 = sbr.rel (0) target = $region9
    $region8: #{tpu_custom_call.1} parent=1 // pred_region
      %s35 = ssub.s32 80, 80
      %36 = vsyncadd [#allocation9], %s35
      %s38 = sshll.u32 [#allocation8], 4
      %s39 = int_to_ptr.vmem [resolvable:$true] %s38
      %41 = dma.hbm_to_vmem [thread:$0]  %s1, 80, %s39, [#allocation9]
    $region9: #{tpu_custom_call.1} parent=1 // pred_fallthru
      _
    // Predicated region
    $region10: #{tpu_custom_call.1} parent=1 // pred_check
      _
    $region11: #{tpu_custom_call.1} parent=1 // pred_check_branch
      %43 = sbr.rel (0) target = $region13
    $region12: #{tpu_custom_call.1} parent=1 // pred_region
      %s45 = ssub.s32 128, 128
      %46 = vsyncadd [#allocation9], %s45
      %s48 = sshll.u32 [#allocation10], 4
      %s49 = int_to_ptr.vmem [resolvable:$true] %s48
      %51 = dma.hbm_to_vmem [thread:$0]  %s2, 128, %s49, [#allocation9]
    $region13: #{tpu_custom_call.1} parent=1 // pred_fallthru
      _
    // Predicated region
    $region14: #{tpu_custom_call.1} parent=1 // pred_check
      _
    $region15: #{tpu_custom_call.1} parent=1 // pred_check_branch
      %53 = sbr.rel (0) target = $region17
    $region16: #{tpu_custom_call.1} parent=1 // pred_region
      %s55 = ssub.s32 128, 128
      %56 = vsyncadd [#allocation12], %s55
      %s58 = sshll.u32 [#allocation11], 4
      %s59 = int_to_ptr.vmem [resolvable:$true] %s58
      %61 = dma.hbm_to_vmem [thread:$0]  %s3, 128, %s59, [#allocation12]
    $region17: #{tpu_custom_call.1} parent=1 // pred_fallthru
      _
    // Predicated region
    $region18: #{tpu_custom_call.1} parent=1 // pred_check
      _
    $region19: #{tpu_custom_call.1} parent=1 // pred_check_branch
      %63 = sbr.rel (0) target = $region21
    $region20: #{tpu_custom_call.1} parent=1 // pred_region
      %s65 = ssub.s32 128, 128
      %66 = vsyncadd [#allocation12], %s65
      %s68 = sshll.u32 [#allocation13], 4
      %s69 = int_to_ptr.vmem [resolvable:$true] %s68
      %71 = dma.hbm_to_vmem [thread:$0]  %s4, 128, %s69, [#allocation12]
    $region21: #{tpu_custom_call.1} parent=1 // pred_fallthru
      _
    // Predicated region
    $region22: #{tpu_custom_call.1} parent=1 // pred_check
      _
    $region23: #{tpu_custom_call.1} parent=1 // pred_check_branch
      %73 = sbr.rel (0) target = $region25
    $region24: #{tpu_custom_call.1} parent=1 // pred_region
      %s75 = ssub.s32 128, 128
      %76 = vsyncadd [#allocation15], %s75
      %s78 = sshll.u32 [#allocation14], 4
      %s79 = int_to_ptr.vmem [resolvable:$true] %s78
      %81 = dma.hbm_to_vmem [thread:$0]  %s5, 128, %s79, [#allocation15]
    $region25: #{tpu_custom_call.1} parent=1 // pred_fallthru
      _
    // Predicated region
    $region26: #{tpu_custom_call.1} parent=1 // pred_check
      _
    $region27: #{tpu_custom_call.1} parent=1 // pred_check_branch
      %83 = sbr.rel (0) target = $region29
    $region28: #{tpu_custom_call.1} parent=1 // pred_region
      %s85 = ssub.s32 128, 128
      %86 = vsyncadd [#allocation15], %s85
      %s88 = sshll.u32 [#allocation16], 4
      %s89 = int_to_ptr.vmem [resolvable:$true] %s88
      %91 = dma.hbm_to_vmem [thread:$0]  %s6, 128, %s89, [#allocation15]
    $region29: #{tpu_custom_call.1} parent=1 // pred_fallthru
      _
    // Predicated region
    $region30: #{tpu_custom_call.1} parent=1 // pred_check
      _
    $region31: #{tpu_custom_call.1} parent=1 // pred_check_branch
      %93 = sbr.rel (0) target = $region33
    $region32: #{tpu_custom_call.1} parent=1 // pred_region
      %s95 = ssub.s32 128, 128
      %96 = vsyncadd [#allocation18], %s95
      %s98 = sshll.u32 [#allocation17], 4
      %s99 = int_to_ptr.vmem [resolvable:$true] %s98
      %101 = dma.hbm_to_vmem [thread:$0]  %s7, 128, %s99, [#allocation18]
    $region33: #{tpu_custom_call.1} parent=1 // pred_fallthru
      _
    // Predicated region
    $region34: #{tpu_custom_call.1} parent=1 // pred_check
      _
    $region35: #{tpu_custom_call.1} parent=1 // pred_check_branch
      %103 = sbr.rel (0) target = $region37
    $region36: #{tpu_custom_call.1} parent=1 // pred_region
      %s105 = ssub.s32 128, 128
      %106 = vsyncadd [#allocation18], %s105
      %s108 = sshll.u32 [#allocation19], 4
      %s109 = int_to_ptr.vmem [resolvable:$true] %s108
      %111 = dma.hbm_to_vmem [thread:$0]  %s8, 128, %s109, [#allocation18]
    $region37: #{tpu_custom_call.1} parent=1 // pred_fallthru
      _
    // Predicated region
    $region38: #{tpu_custom_call.1} parent=1 // pred_check
      _
    $region39: #{tpu_custom_call.1} parent=1 // pred_check_branch
      %113 = sbr.rel (0) target = $region41
    $region40: #{tpu_custom_call.1} parent=1 // pred_region
      %s115 = ssub.s32 128, 128
      %116 = vsyncadd [#allocation21], %s115
      %s118 = sshll.u32 [#allocation20], 4
      %s119 = int_to_ptr.vmem [resolvable:$true] %s118
      %121 = dma.hbm_to_vmem [thread:$0]  %s9, 128, %s119, [#allocation21]
    $region41: #{tpu_custom_call.1} parent=1 // pred_fallthru
      _
    // Predicated region
    $region42: #{tpu_custom_call.1} parent=1 // pred_check
      _
    $region43: #{tpu_custom_call.1} parent=1 // pred_check_branch
      %123 = sbr.rel (0) target = $region45
    $region44: #{tpu_custom_call.1} parent=1 // pred_region
      %124 = dma.done [#allocation6], 384
    $region45: #{tpu_custom_call.1} parent=1 // pred_fallthru
      _
    // Predicated region
    $region46: #{tpu_custom_call.1} parent=1 // pred_check
      _
    $region47: #{tpu_custom_call.1} parent=1 // pred_check_branch
      %126 = sbr.rel (0) target = $region49
    $region48: #{tpu_custom_call.1} parent=1 // pred_region
      %127 = dma.done [#allocation9], 80
    $region49: #{tpu_custom_call.1} parent=1 // pred_fallthru
      _
    // Predicated region
    $region50: #{tpu_custom_call.1} parent=1 // pred_check
      _
    $region51: #{tpu_custom_call.1} parent=1 // pred_check_branch
      %129 = sbr.rel (0) target = $region53
    $region52: #{tpu_custom_call.1} parent=1 // pred_region
      %130 = dma.done [#allocation9], 128
    $region53: #{tpu_custom_call.1} parent=1 // pred_fallthru
      _
    // Predicated region
    $region54: #{tpu_custom_call.1} parent=1 // pred_check
      _
    $region55: #{tpu_custom_call.1} parent=1 // pred_check_branch
      %132 = sbr.rel (0) target = $region57
    $region56: #{tpu_custom_call.1} parent=1 // pred_region
      %133 = dma.done [#allocation12], 128
    $region57: #{tpu_custom_call.1} parent=1 // pred_fallthru
      _
    // Predicated region
    $region58: #{tpu_custom_call.1} parent=1 // pred_check
      _
    $region59: #{tpu_custom_call.1} parent=1 // pred_check_branch
      %135 = sbr.rel (0) target = $region61
    $region60: #{tpu_custom_call.1} parent=1 // pred_region
      %136 = dma.done [#allocation12], 128
    $region61: #{tpu_custom_call.1} parent=1 // pred_fallthru
      _
    // Predicated region
    $region62: #{tpu_custom_call.1} parent=1 // pred_check
      _
    $region63: #{tpu_custom_call.1} parent=1 // pred_check_branch
      %138 = sbr.rel (0) target = $region65
    $region64: #{tpu_custom_call.1} parent=1 // pred_region
      %139 = dma.done [#allocation15], 128
    $region65: #{tpu_custom_call.1} parent=1 // pred_fallthru
      _
    // Predicated region
    $region66: #{tpu_custom_call.1} parent=1 // pred_check
      _
    $region67: #{tpu_custom_call.1} parent=1 // pred_check_branch
      %141 = sbr.rel (0) target = $region69
    $region68: #{tpu_custom_call.1} parent=1 // pred_region
      %142 = dma.done [#allocation15], 128
    $region69: #{tpu_custom_call.1} parent=1 // pred_fallthru
      _
    // Predicated region
    $region70: #{tpu_custom_call.1} parent=1 // pred_check
      _
    $region71: #{tpu_custom_call.1} parent=1 // pred_check_branch
      %144 = sbr.rel (0) target = $region73
    $region72: #{tpu_custom_call.1} parent=1 // pred_region
      %145 = dma.done [#allocation18], 128
    $region73: #{tpu_custom_call.1} parent=1 // pred_fallthru
      _
    // Predicated region
    $region74: #{tpu_custom_call.1} parent=1 // pred_check
      _
    $region75: #{tpu_custom_call.1} parent=1 // pred_check_branch
      %147 = sbr.rel (0) target = $region77
    $region76: #{tpu_custom_call.1} parent=1 // pred_region
      %148 = dma.done [#allocation18], 128
    $region77: #{tpu_custom_call.1} parent=1 // pred_fallthru
      _
    // Predicated region
    $region78: #{tpu_custom_call.1} parent=1 // pred_check
      _
    $region79: #{tpu_custom_call.1} parent=1 // pred_check_branch
      %150 = sbr.rel (0) target = $region81
    $region80: #{tpu_custom_call.1} parent=1 // pred_region
      %151 = dma.done [#allocation21], 128
    $region81: #{tpu_custom_call.1} parent=1 // pred_fallthru
      _
    %v152 = vld [vmem:[#allocation8] sm:$0x1f]
    %v153 = vld [vmem:[#allocation5] sm:$0xff]
    %v154 = vld [vmem:[#allocation5 + $0x8] sm:$0xff]
    %v155 = vld [vmem:[#allocation5 + $0x10] sm:$0xf]
    %v158 = vcombine.high %v153, %v153
    %v159 = vcombine.high %v154, %v154
    %162 = vst [vmem:[#allocation2] sm:$0xf] %v153
    %163 = vst [vmem:[#allocation2 + $0x8] sm:$0xf] %v158
    %164 = vst [vmem:[#allocation2 + $0x10] sm:$0xf] %v154
    %165 = vst [vmem:[#allocation2 + $0x18] sm:$0xf] %v159
    %vm166 = vcmask 814080
    %167 = vst.msk [vmem:[#allocation2 + $0x20] sm:$0xf] %vm166, %v155
    %v168 = vld [vmem:[#allocation5] sm:$0xff]
    %v169 = vld [vmem:[#allocation5 + $0x8] sm:$0xff]
    %v170 = vld [vmem:[#allocation5 + $0x10] sm:$0xf]
    %v174 = vcombine.low %v168, %v168
    %v175 = vcombine.low %v169, %v169
    %v176 = vcombine.low %v170, %v170
    %177 = vrot.lane.b32.xlu0 %v174, 127
    %v178 = vpop.permute.xlu0 %177
    %179 = vrot.lane.b32.xlu0 %v168, 127
    %v180 = vpop.permute.xlu0 %179
    %181 = vrot.lane.b32.xlu0 %v175, 127
    %v182 = vpop.permute.xlu0 %181
    %183 = vrot.lane.b32.xlu0 %v169, 127
    %v184 = vpop.permute.xlu0 %183
    %185 = vrot.lane.b32.xlu0 %v176, 127
    %v186 = vpop.permute.xlu0 %185
    %vm187 = vcmask 1039360
    %v188 = vsel %vm187, %v178, %v180
    %v189 = vsel %vm187, %v180, %v182
    %v190 = vsel %vm187, %v182, %v184
    %v191 = vsel %vm187, %v184, %v186
    %197 = vst [vmem:[#allocation2] sm:$0xf0] %v188
    %198 = vst [vmem:[#allocation2 + $0x8] sm:$0xf0] %v189
    %199 = vst [vmem:[#allocation2 + $0x10] sm:$0xf0] %v190
    %200 = vst [vmem:[#allocation2 + $0x18] sm:$0xf0] %v191
    %vm201 = vcmask 818180
    %202 = vst.msk [vmem:[#allocation2 + $0x20] sm:$0xf0] %vm201, %v186
    %v203 = vld [vmem:[#allocation5] sm:$0xff]
    %v204 = vld [vmem:[#allocation5 + $0x8] sm:$0xff]
    %v205 = vld [vmem:[#allocation5 + $0x10] sm:$0xf]
    %v209 = vcombine.high %v203, %v203
    %v210 = vcombine.high %v204, %v204
    %211 = vrot.lane.b32.xlu0 %v203, 126
    %v212 = vpop.permute.xlu0 %211
    %213 = vrot.lane.b32.xlu0 %v209, 126
    %v214 = vpop.permute.xlu0 %213
    %215 = vrot.lane.b32.xlu0 %v204, 126
    %v216 = vpop.permute.xlu0 %215
    %217 = vrot.lane.b32.xlu0 %v210, 126
    %v218 = vpop.permute.xlu0 %217
    %219 = vrot.lane.b32.xlu0 %v205, 126
    %v220 = vpop.permute.xlu0 %219
    %vm221 = vcmask 1031168
    %v222 = vsel %vm221, %v212, %v214
    %v223 = vsel %vm221, %v214, %v216
    %v224 = vsel %vm221, %v216, %v218
    %v225 = vsel %vm221, %v218, %v220
    %231 = vst [vmem:[#allocation2 + $0x28] sm:$0xf] %v222
    %232 = vst [vmem:[#allocation2 + $0x30] sm:$0xf] %v223
    %233 = vst [vmem:[#allocation2 + $0x38] sm:$0xf] %v224
    %234 = vst [vmem:[#allocation2 + $0x40] sm:$0xf] %v225
    %235 = vst.msk [vmem:[#allocation2 + $0x48] sm:$0xf] %vm166, %v220
    %v236 = vld [vmem:[#allocation5] sm:$0xff]
    %v237 = vld [vmem:[#allocation5 + $0x8] sm:$0xff]
    %v238 = vld [vmem:[#allocation5 + $0x10] sm:$0xf]
    %v242 = vcombine.low %v236, %v236
    %v243 = vcombine.low %v237, %v237
    %v244 = vcombine.low %v238, %v238
    %245 = vrot.lane.b32.xlu0 %v242, 110
    %v246 = vpop.permute.xlu0 %245
    %247 = vrot.lane.b32.xlu0 %v236, 110
    %v248 = vpop.permute.xlu0 %247
    %249 = vrot.lane.b32.xlu0 %v243, 110
    %v250 = vpop.permute.xlu0 %249
    %251 = vrot.lane.b32.xlu0 %v237, 110
    %v252 = vpop.permute.xlu0 %251
    %253 = vrot.lane.b32.xlu0 %v244, 110
    %v254 = vpop.permute.xlu0 %253
    %vm255 = vcmask 900096
    %v256 = vsel %vm255, %v246, %v248
    %v257 = vsel %vm255, %v248, %v250
    %v258 = vsel %vm255, %v250, %v252
    %v259 = vsel %vm255, %v252, %v254
    %265 = vst [vmem:[#allocation2 + $0x28] sm:$0xf0] %v256
    %266 = vst [vmem:[#allocation2 + $0x30] sm:$0xf0] %v257
    %267 = vst [vmem:[#allocation2 + $0x38] sm:$0xf0] %v258
    %268 = vst [vmem:[#allocation2 + $0x40] sm:$0xf0] %v259
    %269 = vst.msk [vmem:[#allocation2 + $0x48] sm:$0xf0] %vm201, %v254
    %v270 = vld [vmem:[#allocation5] sm:$0xff]
    %v271 = vld [vmem:[#allocation5 + $0x8] sm:$0xff]
    %v272 = vld [vmem:[#allocation5 + $0x10] sm:$0xf]
    %v276 = vcombine.high %v270, %v270
    %v277 = vcombine.high %v271, %v271
    %278 = vrot.lane.b32.xlu0 %v270, 109
    %v279 = vpop.permute.xlu0 %278
    %280 = vrot.lane.b32.xlu0 %v276, 109
    %v281 = vpop.permute.xlu0 %280
    %282 = vrot.lane.b32.xlu0 %v271, 109
    %v283 = vpop.permute.xlu0 %282
    %284 = vrot.lane.b32.xlu0 %v277, 109
    %v285 = vpop.permute.xlu0 %284
    %286 = vrot.lane.b32.xlu0 %v272, 109
    %v287 = vpop.permute.xlu0 %286
    %vm288 = vcmask 891904
    %v289 = vsel %vm288, %v279, %v281
    %v290 = vsel %vm288, %v281, %v283
    %v291 = vsel %vm288, %v283, %v285
    %v292 = vsel %vm288, %v285, %v287
    %298 = vst [vmem:[#allocation2 + $0x50] sm:$0xf] %v289
    %299 = vst [vmem:[#allocation2 + $0x58] sm:$0xf] %v290
    %300 = vst [vmem:[#allocation2 + $0x60] sm:$0xf] %v291
    %301 = vst [vmem:[#allocation2 + $0x68] sm:$0xf] %v292
    %302 = vst.msk [vmem:[#allocation2 + $0x70] sm:$0xf] %vm166, %v287
    %v303 = vld [vmem:[#allocation5] sm:$0xff]
    %v304 = vld [vmem:[#allocation5 + $0x8] sm:$0xff]
    %v305 = vld [vmem:[#allocation5 + $0x10] sm:$0xf]
    %v309 = vcombine.low %v303, %v303
    %v310 = vcombine.low %v304, %v304
    %v311 = vcombine.low %v305, %v305
    %312 = vrot.lane.b32.xlu0 %v309, 108
    %v313 = vpop.permute.xlu0 %312
    %314 = vrot.lane.b32.xlu0 %v303, 108
    %v315 = vpop.permute.xlu0 %314
    %316 = vrot.lane.b32.xlu0 %v310, 108
    %v317 = vpop.permute.xlu0 %316
    %318 = vrot.lane.b32.xlu0 %v304, 108
    %v319 = vpop.permute.xlu0 %318
    %320 = vrot.lane.b32.xlu0 %v311, 108
    %v321 = vpop.permute.xlu0 %320
    %vm322 = vcmask 883712
    %v323 = vsel %vm322, %v313, %v315
    %v324 = vsel %vm322, %v315, %v317
    %v325 = vsel %vm322, %v317, %v319
    %v326 = vsel %vm322, %v319, %v321
    %332 = vst [vmem:[#allocation2 + $0x50] sm:$0xf0] %v323
    %333 = vst [vmem:[#allocation2 + $0x58] sm:$0xf0] %v324
    %334 = vst [vmem:[#allocation2 + $0x60] sm:$0xf0] %v325
    %335 = vst [vmem:[#allocation2 + $0x68] sm:$0xf0] %v326
    %336 = vst.msk [vmem:[#allocation2 + $0x70] sm:$0xf0] %vm201, %v321
    %v337 = vld [vmem:[#allocation5] sm:$0xff]
    %v338 = vld [vmem:[#allocation5 + $0x8] sm:$0xff]
    %v339 = vld [vmem:[#allocation5 + $0x10] sm:$0xff]
    %v343 = vcombine.high %v337, %v337
    %v344 = vcombine.high %v338, %v338
    %v345 = vcombine.high %v339, %v339
    %346 = vrot.lane.b32.xlu0 %v337, 92
    %v347 = vpop.permute.xlu0 %346
    %348 = vrot.lane.b32.xlu0 %v343, 92
    %v349 = vpop.permute.xlu0 %348
    %350 = vrot.lane.b32.xlu0 %v338, 92
    %v351 = vpop.permute.xlu0 %350
    %352 = vrot.lane.b32.xlu0 %v344, 92
    %v353 = vpop.permute.xlu0 %352
    %354 = vrot.lane.b32.xlu0 %v339, 92
    %v355 = vpop.permute.xlu0 %354
    %356 = vrot.lane.b32.xlu0 %v345, 92
    %v357 = vpop.permute.xlu0 %356
    %vm358 = vcmask 752640
    %v359 = vsel %vm358, %v347, %v349
    %v360 = vsel %vm358, %v349, %v351
    %v361 = vsel %vm358, %v351, %v353
    %v362 = vsel %vm358, %v353, %v355
    %v363 = vsel %vm358, %v355, %v357
    %369 = vst [vmem:[#allocation2 + $0x78] sm:$0xf] %v359
    %370 = vst [vmem:[#allocation2 + $0x80] sm:$0xf] %v360
    %371 = vst [vmem:[#allocation2 + $0x88] sm:$0xf] %v361
    %372 = vst [vmem:[#allocation2 + $0x90] sm:$0xf] %v362
    %373 = vst.msk [vmem:[#allocation2 + $0x98] sm:$0xf] %vm166, %v363
    %v374 = vld [vmem:[#allocation5] sm:$0xff]
    %v375 = vld [vmem:[#allocation5 + $0x8] sm:$0xff]
    %v376 = vld [vmem:[#allocation5 + $0x10] sm:$0xff]
    %v380 = vcombine.low %v374, %v374
    %v381 = vcombine.low %v375, %v375
    %v382 = vcombine.low %v376, %v376
    %383 = vrot.lane.b32.xlu0 %v380, 91
    %v384 = vpop.permute.xlu0 %383
    %385 = vrot.lane.b32.xlu0 %v374, 91
    %v386 = vpop.permute.xlu0 %385
    %387 = vrot.lane.b32.xlu0 %v381, 91
    %v388 = vpop.permute.xlu0 %387
    %389 = vrot.lane.b32.xlu0 %v375, 91
    %v390 = vpop.permute.xlu0 %389
    %391 = vrot.lane.b32.xlu0 %v382, 91
    %v392 = vpop.permute.xlu0 %391
    %393 = vrot.lane.b32.xlu0 %v376, 91
    %v394 = vpop.permute.xlu0 %393
    %vm395 = vcmask 744448
    %v396 = vsel %vm395, %v384, %v386
    %v397 = vsel %vm395, %v386, %v388
    %v398 = vsel %vm395, %v388, %v390
    %v399 = vsel %vm395, %v390, %v392
    %v400 = vsel %vm395, %v392, %v394
    %406 = vst [vmem:[#allocation2 + $0x78] sm:$0xf0] %v396
    %407 = vst [vmem:[#allocation2 + $0x80] sm:$0xf0] %v397
    %408 = vst [vmem:[#allocation2 + $0x88] sm:$0xf0] %v398
    %409 = vst [vmem:[#allocation2 + $0x90] sm:$0xf0] %v399
    %410 = vst.msk [vmem:[#allocation2 + $0x98] sm:$0xf0] %vm201, %v400
    %v411 = vld [vmem:[#allocation5] sm:$0xff]
    %v412 = vld [vmem:[#allocation5 + $0x8] sm:$0xff]
    %v413 = vld [vmem:[#allocation5 + $0x10] sm:$0xff]
    %v417 = vcombine.high %v411, %v411
    %v418 = vcombine.high %v412, %v412
    %v419 = vcombine.high %v413, %v413
    %420 = vrot.lane.b32.xlu0 %v411, 90
    %v421 = vpop.permute.xlu0 %420
    %422 = vrot.lane.b32.xlu0 %v417, 90
    %v423 = vpop.permute.xlu0 %422
    %424 = vrot.lane.b32.xlu0 %v412, 90
    %v425 = vpop.permute.xlu0 %424
    %426 = vrot.lane.b32.xlu0 %v418, 90
    %v427 = vpop.permute.xlu0 %426
    %428 = vrot.lane.b32.xlu0 %v413, 90
    %v429 = vpop.permute.xlu0 %428
    %430 = vrot.lane.b32.xlu0 %v419, 90
    %v431 = vpop.permute.xlu0 %430
    %vm432 = vcmask 736256
    %v433 = vsel %vm432, %v421, %v423
    %v434 = vsel %vm432, %v423, %v425
    %v435 = vsel %vm432, %v425, %v427
    %v436 = vsel %vm432, %v427, %v429
    %v437 = vsel %vm432, %v429, %v431
    %443 = vst [vmem:[#allocation2 + $0xa0] sm:$0xf] %v433
    %444 = vst [vmem:[#allocation2 + $0xa8] sm:$0xf] %v434
    %445 = vst [vmem:[#allocation2 + $0xb0] sm:$0xf] %v435
    %446 = vst [vmem:[#allocation2 + $0xb8] sm:$0xf] %v436
    %447 = vst.msk [vmem:[#allocation2 + $0xc0] sm:$0xf] %vm166, %v437
    %v448 = vld [vmem:[#allocation10] sm:$0xff]
    %v449 = vld [vmem:[#allocation2] sm:$0xff]
    %v450 = vld [vmem:[#allocation2 + $0x8] sm:$0xff]
    %v451 = vld [vmem:[#allocation2 + $0x10] sm:$0xff]
    %v452 = vld [vmem:[#allocation2 + $0x18] sm:$0xff]
    %v453 = vld [vmem:[#allocation2 + $0x20] sm:$0xff]
    %v454 = vld [vmem:[#allocation2 + $0x28] sm:$0xff]
    %v455 = vld [vmem:[#allocation2 + $0x30] sm:$0xff]
    %v456 = vld [vmem:[#allocation2 + $0x38] sm:$0xff]
    %v457 = vld [vmem:[#allocation2 + $0x40] sm:$0xff]
    %v458 = vld [vmem:[#allocation2 + $0x48] sm:$0xff]
    %v459 = vld [vmem:[#allocation2 + $0x50] sm:$0xff]
    %v460 = vld [vmem:[#allocation2 + $0x58] sm:$0xff]
    %v461 = vld [vmem:[#allocation2 + $0x60] sm:$0xff]
    %v462 = vld [vmem:[#allocation2 + $0x68] sm:$0xff]
    %v463 = vld [vmem:[#allocation2 + $0x70] sm:$0xff]
    %v464 = vld [vmem:[#allocation2 + $0x78] sm:$0xff]
    %v465 = vld [vmem:[#allocation2 + $0x80] sm:$0xff]
    %v466 = vld [vmem:[#allocation2 + $0x88] sm:$0xff]
    %v467 = vld [vmem:[#allocation2 + $0x90] sm:$0xff]
    %v468 = vld [vmem:[#allocation2 + $0x98] sm:$0xff]
    %v469 = vld [vmem:[#allocation2 + $0xa0] sm:$0xf]
    %v470 = vld [vmem:[#allocation2 + $0xa8] sm:$0xf]
    %v471 = vld [vmem:[#allocation2 + $0xb0] sm:$0xf]
    %v472 = vld [vmem:[#allocation2 + $0xb8] sm:$0xf]
    %v473 = vld [vmem:[#allocation2 + $0xc0] sm:$0xf]
    %v474 = vld [vmem:[#allocation11] sm:$0xff]
    %476 = vset.pattern.permute.xlu0 0
    %477 = vperm.xlu0 %476, %v474
    %v478 = vpop.permute.xlu0 %477
    %vm480 = vcmask 293888
    %v482 = vsel %vm480, %v448, 0
    %vm484 = vcmask 1043456
    %v486 = vsel %vm484, %v469, 0
    %v489 = vsel %vm484, %v470, 0
    %v492 = vsel %vm484, %v471, 0
    %v495 = vsel %vm484, %v472, 0
    %v498 = vsel %vm484, %v473, 0
    %500 = vmatprep.subr.mxu0 %v450
    %501 = vmatpush1.msra.mxu0 %v449
    %502 = vmatprep.subr.mxu0 %v455
    %503 = vmatpush1.msra.mxu0 %v454
    %504 = vmatprep.subr.mxu0 %v460
    %505 = vmatpush1.msra.mxu0 %v459
    %506 = vmatprep.subr.mxu0 %v465
    %507 = vmatpush1.msra.mxu0 %v464
    %508 = vmatprep.subr.mxu0 %v489
    %509 = vmatpush1.msra.mxu0 %v486
    %510 = vmatprep.subr.mxu0 0.0
    %511 = vmatpush1.msra.mxu0 0.0
    %512 = vmatprep.subr.mxu0 0.0
    %513 = vmatpush1.msra.mxu0 0.0
    %514 = vmatprep.subr.mxu0 0.0
    %515 = vmatpush1.msra.mxu0 0.0
    %516 = vmatprep.subr.mxu0 0.0
    %517 = vmatpush1.msra.mxu0 0.0
    %518 = vmatprep.subr.mxu0 0.0
    %519 = vmatpush1.msra.mxu0 0.0
    %520 = vmatprep.subr.mxu0 0.0
    %521 = vmatpush1.msra.mxu0 0.0
    %522 = vmatprep.subr.mxu0 0.0
    %523 = vmatpush1.msra.mxu0 0.0
    %524 = vmatprep.subr.mxu0 0.0
    %525 = vmatpush1.msra.mxu0 0.0
    %526 = vmatprep.subr.mxu0 0.0
    %527 = vmatpush1.msra.mxu0 0.0
    %528 = vmatprep.subr.mxu0 0.0
    %529 = vmatpush1.msra.mxu0 0.0
    %530 = vmatprep.subr.mxu0 0.0
    %531 = vmatpush1.msra.mxu0 0.0
    %532 = vmatprep.subr.mxu0 0.0
    %533 = vmatpush1.msra.mxu0 0.0
    %534 = vmatprep.subr.mxu0 0.0
    %535 = vmatpush1.msra.mxu0 0.0
    %536 = vmatprep.subr.mxu0 0.0
    %537 = vmatpush1.msra.mxu0 0.0
    %538 = vmatprep.subr.mxu0 0.0
    %539 = vmatpush1.msra.mxu0 0.0
    %540 = vmatprep.subr.mxu0 0.0
    %541 = vmatpush1.msra.mxu0 0.0
    %542 = vmatprep.subr.mxu0 0.0
    %543 = vmatpush1.msra.mxu0 0.0
    %544 = vmatprep.subr.mxu0 0.0
    %545 = vmatpush1.msra.mxu0 0.0
    %546 = vmatprep.subr.mxu0 0.0
    %547 = vmatpush1.msra.mxu0 0.0
    %548 = vmatprep.subr.mxu0 0.0
    %549 = vmatpush1.msra.mxu0 0.0
    %550 = vmatprep.subr.mxu0 0.0
    %551 = vmatpush1.msra.mxu0 0.0
    %552 = vmatprep.subr.mxu0 0.0
    %553 = vmatpush1.msra.mxu0 0.0
    %554 = vmatprep.subr.mxu0 0.0
    %555 = vmatpush1.msra.mxu0 0.0
    %556 = vmatprep.subr.mxu0 0.0
    %557 = vmatpush1.msra.mxu0 0.0
    %558 = vmatprep.subr.mxu0 0.0
    %559 = vmatpush1.msra.mxu0 0.0
    %560 = vmatprep.subr.mxu0 0.0
    %561 = vmatpush1.msra.mxu0 0.0
    %562 = vmatprep.subr.mxu0 0.0
    %563 = vmatpush1.msra.mxu0 0.0
    %564 = vmatprep.mubr.f32.mxu0 0.0
    %565 = vmatmul.mubr.f32.gmra.mrb[0].mxu0 %v482
    %v566 = vpop.f32.mrb[0].mxu0
    %v567 = vadd.f32 %v478, %v566
    %v568 = vpop.f32.mrb[0].mxu0
    %v569 = vadd.f32 %v478, %v568
    %570 = vdwg.mxu0
    %571 = vmatprep.subr.mxu0 %v452
    %572 = vmatpush1.msra.mxu0 %v451
    %573 = vmatprep.subr.mxu0 %v457
    %574 = vmatpush1.msra.mxu0 %v456
    %575 = vmatprep.subr.mxu0 %v462
    %576 = vmatpush1.msra.mxu0 %v461
    %577 = vmatprep.subr.mxu0 %v467
    %578 = vmatpush1.msra.mxu0 %v466
    %579 = vmatprep.subr.mxu0 %v495
    %580 = vmatpush1.msra.mxu0 %v492
    %581 = vmatprep.subr.mxu0 0.0
    %582 = vmatpush1.msra.mxu0 0.0
    %583 = vmatprep.subr.mxu0 0.0
    %584 = vmatpush1.msra.mxu0 0.0
    %585 = vmatprep.subr.mxu0 0.0
    %586 = vmatpush1.msra.mxu0 0.0
    %587 = vmatprep.subr.mxu0 0.0
    %588 = vmatpush1.msra.mxu0 0.0
    %589 = vmatprep.subr.mxu0 0.0
    %590 = vmatpush1.msra.mxu0 0.0
    %591 = vmatprep.subr.mxu0 0.0
    %592 = vmatpush1.msra.mxu0 0.0
    %593 = vmatprep.subr.mxu0 0.0
    %594 = vmatpush1.msra.mxu0 0.0
    %595 = vmatprep.subr.mxu0 0.0
    %596 = vmatpush1.msra.mxu0 0.0
    %597 = vmatprep.subr.mxu0 0.0
    %598 = vmatpush1.msra.mxu0 0.0
    %599 = vmatprep.subr.mxu0 0.0
    %600 = vmatpush1.msra.mxu0 0.0
    %601 = vmatprep.subr.mxu0 0.0
    %602 = vmatpush1.msra.mxu0 0.0
    %603 = vmatprep.subr.mxu0 0.0
    %604 = vmatpush1.msra.mxu0 0.0
    %605 = vmatprep.subr.mxu0 0.0
    %606 = vmatpush1.msra.mxu0 0.0
    %607 = vmatprep.subr.mxu0 0.0
    %608 = vmatpush1.msra.mxu0 0.0
    %609 = vmatprep.subr.mxu0 0.0
    %610 = vmatpush1.msra.mxu0 0.0
    %611 = vmatprep.subr.mxu0 0.0
    %612 = vmatpush1.msra.mxu0 0.0
    %613 = vmatprep.subr.mxu0 0.0
    %614 = vmatpush1.msra.mxu0 0.0
    %615 = vmatprep.subr.mxu0 0.0
    %616 = vmatpush1.msra.mxu0 0.0
    %617 = vmatprep.subr.mxu0 0.0
    %618 = vmatpush1.msra.mxu0 0.0
    %619 = vmatprep.subr.mxu0 0.0
    %620 = vmatpush1.msra.mxu0 0.0
    %621 = vmatprep.subr.mxu0 0.0
    %622 = vmatpush1.msra.mxu0 0.0
    %623 = vmatprep.subr.mxu0 0.0
    %624 = vmatpush1.msra.mxu0 0.0
    %625 = vmatprep.subr.mxu0 0.0
    %626 = vmatpush1.msra.mxu0 0.0
    %627 = vmatprep.subr.mxu0 0.0
    %628 = vmatpush1.msra.mxu0 0.0
    %629 = vmatprep.subr.mxu0 0.0
    %630 = vmatpush1.msra.mxu0 0.0
    %631 = vmatprep.subr.mxu0 0.0
    %632 = vmatpush1.msra.mxu0 0.0
    %633 = vmatprep.subr.mxu0 0.0
    %634 = vmatpush1.msra.mxu0 0.0
    %635 = vmatprep.mubr.f32.mxu0 0.0
    %636 = vmatmul.mubr.f32.gmra.mrb[0].mxu0 %v482
    %v637 = vpop.f32.mrb[0].mxu0
    %v638 = vadd.f32 %v478, %v637
    %v639 = vpop.f32.mrb[0].mxu0
    %v640 = vadd.f32 %v478, %v639
    %641 = vdwg.mxu0
    %642 = vmatprep.subr.mxu0 0.0
    %643 = vmatpush1.msra.mxu0 %v453
    %644 = vmatprep.subr.mxu0 0.0
    %645 = vmatpush1.msra.mxu0 %v458
    %646 = vmatprep.subr.mxu0 0.0
    %647 = vmatpush1.msra.mxu0 %v463
    %648 = vmatprep.subr.mxu0 0.0
    %649 = vmatpush1.msra.mxu0 %v468
    %650 = vmatprep.subr.mxu0 0.0
    %651 = vmatpush1.msra.mxu0 %v498
    %652 = vmatprep.subr.mxu0 0.0
    %653 = vmatpush1.msra.mxu0 0.0
    %654 = vmatprep.subr.mxu0 0.0
    %655 = vmatpush1.msra.mxu0 0.0
    %656 = vmatprep.subr.mxu0 0.0
    %657 = vmatpush1.msra.mxu0 0.0
    %658 = vmatprep.subr.mxu0 0.0
    %659 = vmatpush1.msra.mxu0 0.0
    %660 = vmatprep.subr.mxu0 0.0
    %661 = vmatpush1.msra.mxu0 0.0
    %662 = vmatprep.subr.mxu0 0.0
    %663 = vmatpush1.msra.mxu0 0.0
    %664 = vmatprep.subr.mxu0 0.0
    %665 = vmatpush1.msra.mxu0 0.0
    %666 = vmatprep.subr.mxu0 0.0
    %667 = vmatpush1.msra.mxu0 0.0
    %668 = vmatprep.subr.mxu0 0.0
    %669 = vmatpush1.msra.mxu0 0.0
    %670 = vmatprep.subr.mxu0 0.0
    %671 = vmatpush1.msra.mxu0 0.0
    %672 = vmatprep.subr.mxu0 0.0
    %673 = vmatpush1.msra.mxu0 0.0
    %674 = vmatprep.subr.mxu0 0.0
    %675 = vmatpush1.msra.mxu0 0.0
    %676 = vmatprep.subr.mxu0 0.0
    %677 = vmatpush1.msra.mxu0 0.0
    %678 = vmatprep.subr.mxu0 0.0
    %679 = vmatpush1.msra.mxu0 0.0
    %680 = vmatprep.subr.mxu0 0.0
    %681 = vmatpush1.msra.mxu0 0.0
    %682 = vmatprep.subr.mxu0 0.0
    %683 = vmatpush1.msra.mxu0 0.0
    %684 = vmatprep.subr.mxu0 0.0
    %685 = vmatpush1.msra.mxu0 0.0
    %686 = vmatprep.subr.mxu0 0.0
    %687 = vmatpush1.msra.mxu0 0.0
    %688 = vmatprep.subr.mxu0 0.0
    %689 = vmatpush1.msra.mxu0 0.0
    %690 = vmatprep.subr.mxu0 0.0
    %691 = vmatpush1.msra.mxu0 0.0
    %692 = vmatprep.subr.mxu0 0.0
    %693 = vmatpush1.msra.mxu0 0.0
    %694 = vmatprep.subr.mxu0 0.0
    %695 = vmatpush1.msra.mxu0 0.0
    %696 = vmatprep.subr.mxu0 0.0
    %697 = vmatpush1.msra.mxu0 0.0
    %698 = vmatprep.subr.mxu0 0.0
    %699 = vmatpush1.msra.mxu0 0.0
    %700 = vmatprep.subr.mxu0 0.0
    %701 = vmatpush1.msra.mxu0 0.0
    %702 = vmatprep.subr.mxu0 0.0
    %703 = vmatpush1.msra.mxu0 0.0
    %704 = vmatprep.subr.mxu0 0.0
    %705 = vmatpush1.msra.mxu0 0.0
    %706 = vmatprep.mubr.f32.mxu0 0.0
    %707 = vmatmul.mubr.f32.gmra.mrb[0].mxu0 %v482
    %v708 = vpop.f32.mrb[0].mxu0
    %v709 = vadd.f32 %v478, %v708
    %v710 = vpop.f32.mrb[0].mxu0
    %711 = vdwg.mxu0
    %v713 = vlaneseq
    %v714 = vshrl.u32 %v713, 7
    %v715 = vsub.s32 0, %v714
    %v716 = vrot.slane %v152, %v715
    %v717 = vlaneseq
    %v718 = vshrl.u32 %v717, 7
    %v719 = vsub.s32 1, %v718
    %v720 = vrot.slane %v152, %v719
    %v721 = vlaneseq
    %v722 = vshrl.u32 %v721, 7
    %v723 = vsub.s32 2, %v722
    %v724 = vrot.slane %v152, %v723
    %v725 = vlaneseq
    %v726 = vshrl.u32 %v725, 7
    %v727 = vsub.s32 3, %v726
    %v728 = vrot.slane %v152, %v727
    %v729 = vlaneseq
    %v730 = vshrl.u32 %v729, 7
    %v731 = vsub.s32 4, %v730
    %v732 = vrot.slane %v152, %v731
    %v738 = vmul.f32 %v567, %v716
    %v739 = vmul.f32 %v569, %v720
    %v740 = vmul.f32 %v638, %v724
    %v741 = vmul.f32 %v640, %v728
    %v742 = vmul.f32 %v709, %v732
    %v743 = vadd.f32 %v738, %v739
    %v744 = vadd.f32 %v743, %v740
    %v745 = vadd.f32 %v744, %v741
    %vm746 = vcmask 818176
    %v747 = vsel %vm746, %v742, 0.0
    %v748 = vadd.f32 %v745, %v747
    %749 = vadd.xlane.f32.xlu0 %v748
    %v750 = vpop.xlane.xlu0 %749
    %v751 = vmul.f32 %v750, 0.001953125
    %v752 = vsub.f32 %v567, %v751
    %v753 = vsub.f32 %v569, %v751
    %v754 = vsub.f32 %v638, %v751
    %v755 = vsub.f32 %v640, %v751
    %v756 = vsub.f32 %v709, %v751
    %v757 = vmul.f32 %v752, %v716
    %v758 = vmul.f32 %v753, %v720
    %v759 = vmul.f32 %v754, %v724
    %v760 = vmul.f32 %v755, %v728
    %v761 = vmul.f32 %v756, %v732
    %v762 = vmul.f32 %v757, %v757
    %v763 = vmul.f32 %v758, %v758
    %v764 = vmul.f32 %v759, %v759
    %v765 = vmul.f32 %v760, %v760
    %v766 = vmul.f32 %v761, %v761
    %v767 = vadd.f32 %v762, %v763
    %v768 = vadd.f32 %v767, %v764
    %v769 = vadd.f32 %v768, %v765
    %v770 = vsel %vm746, %v766, 0.0
    %v771 = vadd.f32 %v769, %v770
    %772 = vadd.xlane.f32.xlu0 %v771
    %v773 = vpop.xlane.xlu0 %772
    %v774 = vmul.f32 %v773, 0.001953125
    %v775 = vld [vmem:[#allocation13] sm:$0xff]
    %v776 = vadd.f32 %v774, 1e-05
    %v777 = vrsqrt.pop %v776
    %v778 = vmul.f32 %v775, %v777
    %v779 = vld [vmem:[#allocation14] sm:$0xff]
    %v780 = vmul.f32 %v751, %v778
    %v781 = vsub.f32 %v779, %v780
    %783 = vset.pattern.permute.xlu0 0
    %784 = vperm.xlu0 %783, %v778
    %v785 = vpop.permute.xlu0 %784
    %v787 = vmul.f32 %v567, %v785
    %v788 = vmul.f32 %v569, %v785
    %v789 = vmul.f32 %v638, %v785
    %v790 = vmul.f32 %v640, %v785
    %v791 = vmul.f32 %v709, %v785
    %793 = vset.pattern.permute.xlu0 0
    %794 = vperm.xlu0 %793, %v781
    %v795 = vpop.permute.xlu0 %794
    %v797 = vadd.f32 %v787, %v795
    %v798 = vadd.f32 %v788, %v795
    %v799 = vadd.f32 %v789, %v795
    %v800 = vadd.f32 %v790, %v795
    %v801 = vadd.f32 %v791, %v795
    %vm802 = vcmp.ge.f32.partialorder %v797, 0.0
    %vm803 = vcmp.ge.f32.partialorder %v798, 0.0
    %vm804 = vcmp.ge.f32.partialorder %v799, 0.0
    %vm805 = vcmp.ge.f32.partialorder %v800, 0.0
    %vm806 = vcmp.ge.f32.partialorder %v801, 0.0
    %v807 = vmul.f32 %v797, 0.8
    %v808 = vmul.f32 %v798, 0.8
    %v809 = vmul.f32 %v799, 0.8
    %v810 = vmul.f32 %v800, 0.8
    %v811 = vmul.f32 %v801, 0.8
    %v812 = vsel %vm802, %v797, %v807
    %v813 = vsel %vm803, %v798, %v808
    %v814 = vsel %vm804, %v799, %v809
    %v815 = vsel %vm805, %v800, %v810
    %v816 = vsel %vm806, %v801, %v811
    %817 = vst [vmem:[#allocation3] sm:$0xff] 0.0
    %818 = vst [vmem:[#allocation3 + $0x8] sm:$0xff] 0.0
    %819 = vst [vmem:[#allocation3 + $0x10] sm:$0xff] 0.0
    %820 = vst [vmem:[#allocation3 + $0x18] sm:$0xff] 0.0
    %821 = vst [vmem:[#allocation3 + $0x20] sm:$0xff] 0.0
    %vm822 = vcmask 211968
    %823 = vst.msk [vmem:[#allocation3 + $0x28] sm:$0xff] %vm822, 0.0
    %v824 = vmul.f32 %v812, %v716
    %v825 = vmul.f32 %v813, %v720
    %v826 = vmul.f32 %v814, %v724
    %v827 = vmul.f32 %v815, %v728
    %v828 = vmul.f32 %v816, %v732
    %834 = vrot.lane.b32.xlu0 %v824, 19
    %v835 = vpop.permute.xlu0 %834
    %836 = vrot.lane.b32.xlu0 %v825, 19
    %v837 = vpop.permute.xlu0 %836
    %838 = vrot.lane.b32.xlu0 %v826, 19
    %v839 = vpop.permute.xlu0 %838
    %840 = vrot.lane.b32.xlu0 %v827, 19
    %v841 = vpop.permute.xlu0 %840
    %842 = vrot.lane.b32.xlu0 %v828, 19
    %v843 = vpop.permute.xlu0 %842
    %vm844 = vcmask 154624
    %v845 = vsel %vm844, %v835, %v837
    %v846 = vsel %vm844, %v837, %v839
    %v847 = vsel %vm844, %v839, %v841
    %v848 = vsel %vm844, %v841, %v843
    %vm854 = vcmask 1047704
    %855 = vst.msk [vmem:[#allocation3] sm:$0xff] %vm854, %v835
    %856 = vst [vmem:[#allocation3 + $0x8] sm:$0xff] %v845
    %857 = vst [vmem:[#allocation3 + $0x10] sm:$0xff] %v846
    %858 = vst [vmem:[#allocation3 + $0x18] sm:$0xff] %v847
    %vm859 = vcmask 973824
    %860 = vst.msk [vmem:[#allocation3 + $0x20] sm:$0xff] %vm859, %v848
    %v861 = vld [vmem:[#allocation3] sm:$0xff]
    %v862 = vld [vmem:[#allocation3 + $0x8] sm:$0xff]
    %v863 = vld [vmem:[#allocation3 + $0x10] sm:$0xff]
    %v864 = vld [vmem:[#allocation3 + $0x18] sm:$0xff]
    %v865 = vld [vmem:[#allocation3 + $0x20] sm:$0xff]
    %866 = vst [vmem:[#allocation4] sm:$0xff] %v861
    %867 = vst [vmem:[#allocation4 + $0x8] sm:$0xff] %v862
    %868 = vst [vmem:[#allocation4 + $0x10] sm:$0xff] %v863
    %869 = vst [vmem:[#allocation4 + $0x18] sm:$0xff] %v864
    %870 = vst.msk [vmem:[#allocation4 + $0x20] sm:$0xff] %vm746, %v865
    %v871 = vld [vmem:[#allocation3] sm:$0xff]
    %v872 = vld [vmem:[#allocation3 + $0x8] sm:$0xff]
    %v873 = vld [vmem:[#allocation3 + $0x10] sm:$0xff]
    %v874 = vld [vmem:[#allocation3 + $0x18] sm:$0xff]
    %v875 = vld [vmem:[#allocation3 + $0x20] sm:$0xff]
    %881 = vrot.lane.b32.xlu0 %v871, 127
    %v882 = vpop.permute.xlu0 %881
    %883 = vrot.lane.b32.xlu0 %v872, 127
    %v884 = vpop.permute.xlu0 %883
    %885 = vrot.lane.b32.xlu0 %v873, 127
    %v886 = vpop.permute.xlu0 %885
    %887 = vrot.lane.b32.xlu0 %v874, 127
    %v888 = vpop.permute.xlu0 %887
    %889 = vrot.lane.b32.xlu0 %v875, 127
    %v890 = vpop.permute.xlu0 %889
    %v891 = vsel %vm187, %v882, %v884
    %v892 = vsel %vm187, %v884, %v886
    %v893 = vsel %vm187, %v886, %v888
    %v894 = vsel %vm187, %v888, %v890
    %900 = vst [vmem:[#allocation4 + $0x28] sm:$0xff] %v891
    %901 = vst [vmem:[#allocation4 + $0x30] sm:$0xff] %v892
    %902 = vst [vmem:[#allocation4 + $0x38] sm:$0xff] %v893
    %903 = vst [vmem:[#allocation4 + $0x40] sm:$0xff] %v894
    %904 = vst.msk [vmem:[#allocation4 + $0x48] sm:$0xff] %vm746, %v890
    %v905 = vld [vmem:[#allocation3] sm:$0xff]
    %v906 = vld [vmem:[#allocation3 + $0x8] sm:$0xff]
    %v907 = vld [vmem:[#allocation3 + $0x10] sm:$0xff]
    %v908 = vld [vmem:[#allocation3 + $0x18] sm:$0xff]
    %v909 = vld [vmem:[#allocation3 + $0x20] sm:$0xff]
    %915 = vrot.lane.b32.xlu0 %v905, 126
    %v916 = vpop.permute.xlu0 %915
    %917 = vrot.lane.b32.xlu0 %v906, 126
    %v918 = vpop.permute.xlu0 %917
    %919 = vrot.lane.b32.xlu0 %v907, 126
    %v920 = vpop.permute.xlu0 %919
    %921 = vrot.lane.b32.xlu0 %v908, 126
    %v922 = vpop.permute.xlu0 %921
    %923 = vrot.lane.b32.xlu0 %v909, 126
    %v924 = vpop.permute.xlu0 %923
    %v925 = vsel %vm221, %v916, %v918
    %v926 = vsel %vm221, %v918, %v920
    %v927 = vsel %vm221, %v920, %v922
    %v928 = vsel %vm221, %v922, %v924
    %934 = vst [vmem:[#allocation4 + $0x50] sm:$0xff] %v925
    %935 = vst [vmem:[#allocation4 + $0x58] sm:$0xff] %v926
    %936 = vst [vmem:[#allocation4 + $0x60] sm:$0xff] %v927
    %937 = vst [vmem:[#allocation4 + $0x68] sm:$0xff] %v928
    %938 = vst.msk [vmem:[#allocation4 + $0x70] sm:$0xff] %vm746, %v924
    %v939 = vld [vmem:[#allocation3] sm:$0xff]
    %v940 = vld [vmem:[#allocation3 + $0x8] sm:$0xff]
    %v941 = vld [vmem:[#allocation3 + $0x10] sm:$0xff]
    %v942 = vld [vmem:[#allocation3 + $0x18] sm:$0xff]
    %v943 = vld [vmem:[#allocation3 + $0x20] sm:$0xff]
    %949 = vrot.lane.b32.xlu0 %v939, 110
    %v950 = vpop.permute.xlu0 %949
    %951 = vrot.lane.b32.xlu0 %v940, 110
    %v952 = vpop.permute.xlu0 %951
    %953 = vrot.lane.b32.xlu0 %v941, 110
    %v954 = vpop.permute.xlu0 %953
    %955 = vrot.lane.b32.xlu0 %v942, 110
    %v956 = vpop.permute.xlu0 %955
    %957 = vrot.lane.b32.xlu0 %v943, 110
    %v958 = vpop.permute.xlu0 %957
    %v959 = vsel %vm255, %v950, %v952
    %v960 = vsel %vm255, %v952, %v954
    %v961 = vsel %vm255, %v954, %v956
    %v962 = vsel %vm255, %v956, %v958
    %968 = vst [vmem:[#allocation4 + $0x78] sm:$0xff] %v959
    %969 = vst [vmem:[#allocation4 + $0x80] sm:$0xff] %v960
    %970 = vst [vmem:[#allocation4 + $0x88] sm:$0xff] %v961
    %971 = vst [vmem:[#allocation4 + $0x90] sm:$0xff] %v962
    %972 = vst.msk [vmem:[#allocation4 + $0x98] sm:$0xff] %vm746, %v958
    %v973 = vld [vmem:[#allocation3] sm:$0xff]
    %v974 = vld [vmem:[#allocation3 + $0x8] sm:$0xff]
    %v975 = vld [vmem:[#allocation3 + $0x10] sm:$0xff]
    %v976 = vld [vmem:[#allocation3 + $0x18] sm:$0xff]
    %v977 = vld [vmem:[#allocation3 + $0x20] sm:$0xff]
    %983 = vrot.lane.b32.xlu0 %v973, 109
    %v984 = vpop.permute.xlu0 %983
    %985 = vrot.lane.b32.xlu0 %v974, 109
    %v986 = vpop.permute.xlu0 %985
    %987 = vrot.lane.b32.xlu0 %v975, 109
    %v988 = vpop.permute.xlu0 %987
    %989 = vrot.lane.b32.xlu0 %v976, 109
    %v990 = vpop.permute.xlu0 %989
    %991 = vrot.lane.b32.xlu0 %v977, 109
    %v992 = vpop.permute.xlu0 %991
    %v993 = vsel %vm288, %v984, %v986
    %v994 = vsel %vm288, %v986, %v988
    %v995 = vsel %vm288, %v988, %v990
    %v996 = vsel %vm288, %v990, %v992
    %1002 = vst [vmem:[#allocation4 + $0xa0] sm:$0xff] %v993
    %1003 = vst [vmem:[#allocation4 + $0xa8] sm:$0xff] %v994
    %1004 = vst [vmem:[#allocation4 + $0xb0] sm:$0xff] %v995
    %1005 = vst [vmem:[#allocation4 + $0xb8] sm:$0xff] %v996
    %1006 = vst.msk [vmem:[#allocation4 + $0xc0] sm:$0xff] %vm746, %v992
    %v1007 = vld [vmem:[#allocation3] sm:$0xff]
    %v1008 = vld [vmem:[#allocation3 + $0x8] sm:$0xff]
    %v1009 = vld [vmem:[#allocation3 + $0x10] sm:$0xff]
    %v1010 = vld [vmem:[#allocation3 + $0x18] sm:$0xff]
    %v1011 = vld [vmem:[#allocation3 + $0x20] sm:$0xff]
    %1017 = vrot.lane.b32.xlu0 %v1007, 108
    %v1018 = vpop.permute.xlu0 %1017
    %1019 = vrot.lane.b32.xlu0 %v1008, 108
    %v1020 = vpop.permute.xlu0 %1019
    %1021 = vrot.lane.b32.xlu0 %v1009, 108
    %v1022 = vpop.permute.xlu0 %1021
    %1023 = vrot.lane.b32.xlu0 %v1010, 108
    %v1024 = vpop.permute.xlu0 %1023
    %1025 = vrot.lane.b32.xlu0 %v1011, 108
    %v1026 = vpop.permute.xlu0 %1025
    %v1027 = vsel %vm322, %v1018, %v1020
    %v1028 = vsel %vm322, %v1020, %v1022
    %v1029 = vsel %vm322, %v1022, %v1024
    %v1030 = vsel %vm322, %v1024, %v1026
    %1036 = vst [vmem:[#allocation4 + $0xc8] sm:$0xff] %v1027
    %1037 = vst [vmem:[#allocation4 + $0xd0] sm:$0xff] %v1028
    %1038 = vst [vmem:[#allocation4 + $0xd8] sm:$0xff] %v1029
    %1039 = vst [vmem:[#allocation4 + $0xe0] sm:$0xff] %v1030
    %1040 = vst.msk [vmem:[#allocation4 + $0xe8] sm:$0xff] %vm746, %v1026
    %v1041 = vld [vmem:[#allocation3] sm:$0xff]
    %v1042 = vld [vmem:[#allocation3 + $0x8] sm:$0xff]
    %v1043 = vld [vmem:[#allocation3 + $0x10] sm:$0xff]
    %v1044 = vld [vmem:[#allocation3 + $0x18] sm:$0xff]
    %v1045 = vld [vmem:[#allocation3 + $0x20] sm:$0xff]
    %v1046 = vld [vmem:[#allocation3 + $0x28] sm:$0xff]
    %1053 = vrot.lane.b32.xlu0 %v1041, 92
    %v1054 = vpop.permute.xlu0 %1053
    %1055 = vrot.lane.b32.xlu0 %v1042, 92
    %v1056 = vpop.permute.xlu0 %1055
    %1057 = vrot.lane.b32.xlu0 %v1043, 92
    %v1058 = vpop.permute.xlu0 %1057
    %1059 = vrot.lane.b32.xlu0 %v1044, 92
    %v1060 = vpop.permute.xlu0 %1059
    %1061 = vrot.lane.b32.xlu0 %v1045, 92
    %v1062 = vpop.permute.xlu0 %1061
    %1063 = vrot.lane.b32.xlu0 %v1046, 92
    %v1064 = vpop.permute.xlu0 %1063
    %v1065 = vsel %vm358, %v1054, %v1056
    %v1066 = vsel %vm358, %v1056, %v1058
    %v1067 = vsel %vm358, %v1058, %v1060
    %v1068 = vsel %vm358, %v1060, %v1062
    %v1069 = vsel %vm358, %v1062, %v1064
    %1075 = vst [vmem:[#allocation4 + $0xf0] sm:$0xff] %v1065
    %1076 = vst [vmem:[#allocation4 + $0xf8] sm:$0xff] %v1066
    %1077 = vst [vmem:[#allocation4 + $0x100] sm:$0xff] %v1067
    %1078 = vst [vmem:[#allocation4 + $0x108] sm:$0xff] %v1068
    %1079 = vst.msk [vmem:[#allocation4 + $0x110] sm:$0xff] %vm746, %v1069
    %v1080 = vld [vmem:[#allocation3] sm:$0xff]
    %v1081 = vld [vmem:[#allocation3 + $0x8] sm:$0xff]
    %v1082 = vld [vmem:[#allocation3 + $0x10] sm:$0xff]
    %v1083 = vld [vmem:[#allocation3 + $0x18] sm:$0xff]
    %v1084 = vld [vmem:[#allocation3 + $0x20] sm:$0xff]
    %v1085 = vld [vmem:[#allocation3 + $0x28] sm:$0xff]
    %1092 = vrot.lane.b32.xlu0 %v1080, 91
    %v1093 = vpop.permute.xlu0 %1092
    %1094 = vrot.lane.b32.xlu0 %v1081, 91
    %v1095 = vpop.permute.xlu0 %1094
    %1096 = vrot.lane.b32.xlu0 %v1082, 91
    %v1097 = vpop.permute.xlu0 %1096
    %1098 = vrot.lane.b32.xlu0 %v1083, 91
    %v1099 = vpop.permute.xlu0 %1098
    %1100 = vrot.lane.b32.xlu0 %v1084, 91
    %v1101 = vpop.permute.xlu0 %1100
    %1102 = vrot.lane.b32.xlu0 %v1085, 91
    %v1103 = vpop.permute.xlu0 %1102
    %v1104 = vsel %vm395, %v1093, %v1095
    %v1105 = vsel %vm395, %v1095, %v1097
    %v1106 = vsel %vm395, %v1097, %v1099
    %v1107 = vsel %vm395, %v1099, %v1101
    %v1108 = vsel %vm395, %v1101, %v1103
    %1114 = vst [vmem:[#allocation4 + $0x118] sm:$0xff] %v1104
    %1115 = vst [vmem:[#allocation4 + $0x120] sm:$0xff] %v1105
    %1116 = vst [vmem:[#allocation4 + $0x128] sm:$0xff] %v1106
    %1117 = vst [vmem:[#allocation4 + $0x130] sm:$0xff] %v1107
    %1118 = vst.msk [vmem:[#allocation4 + $0x138] sm:$0xff] %vm746, %v1108
    %v1119 = vld [vmem:[#allocation3] sm:$0xff]
    %v1120 = vld [vmem:[#allocation3 + $0x8] sm:$0xff]
    %v1121 = vld [vmem:[#allocation3 + $0x10] sm:$0xff]
    %v1122 = vld [vmem:[#allocation3 + $0x18] sm:$0xff]
    %v1123 = vld [vmem:[#allocation3 + $0x20] sm:$0xff]
    %v1124 = vld [vmem:[#allocation3 + $0x28] sm:$0xff]
    %1131 = vrot.lane.b32.xlu0 %v1119, 90
    %v1132 = vpop.permute.xlu0 %1131
    %1133 = vrot.lane.b32.xlu0 %v1120, 90
    %v1134 = vpop.permute.xlu0 %1133
    %1135 = vrot.lane.b32.xlu0 %v1121, 90
    %v1136 = vpop.permute.xlu0 %1135
    %1137 = vrot.lane.b32.xlu0 %v1122, 90
    %v1138 = vpop.permute.xlu0 %1137
    %1139 = vrot.lane.b32.xlu0 %v1123, 90
    %v1140 = vpop.permute.xlu0 %1139
    %1141 = vrot.lane.b32.xlu0 %v1124, 90
    %v1142 = vpop.permute.xlu0 %1141
    %v1143 = vsel %vm432, %v1132, %v1134
    %v1144 = vsel %vm432, %v1134, %v1136
    %v1145 = vsel %vm432, %v1136, %v1138
    %v1146 = vsel %vm432, %v1138, %v1140
    %v1147 = vsel %vm432, %v1140, %v1142
    %1153 = vst [vmem:[#allocation4 + $0x140] sm:$0xff] %v1143
    %1154 = vst [vmem:[#allocation4 + $0x148] sm:$0xff] %v1144
    %1155 = vst [vmem:[#allocation4 + $0x150] sm:$0xff] %v1145
    %1156 = vst [vmem:[#allocation4 + $0x158] sm:$0xff] %v1146
    %1157 = vst.msk [vmem:[#allocation4 + $0x160] sm:$0xff] %vm746, %v1147
    %v1158 = vld [vmem:[#allocation16] sm:$0xff]
    %v1159 = vld [vmem:[#allocation4] sm:$0xff]
    %v1160 = vld [vmem:[#allocation4 + $0x8] sm:$0xff]
    %v1161 = vld [vmem:[#allocation4 + $0x10] sm:$0xff]
    %v1162 = vld [vmem:[#allocation4 + $0x18] sm:$0xff]
    %v1163 = vld [vmem:[#allocation4 + $0x20] sm:$0xff]
    %v1164 = vld [vmem:[#allocation4 + $0x28] sm:$0xff]
    %v1165 = vld [vmem:[#allocation4 + $0x30] sm:$0xff]
    %v1166 = vld [vmem:[#allocation4 + $0x38] sm:$0xff]
    %v1167 = vld [vmem:[#allocation4 + $0x40] sm:$0xff]
    %v1168 = vld [vmem:[#allocation4 + $0x48] sm:$0xff]
    %v1169 = vld [vmem:[#allocation4 + $0x50] sm:$0xff]
    %v1170 = vld [vmem:[#allocation4 + $0x58] sm:$0xff]
    %v1171 = vld [vmem:[#allocation4 + $0x60] sm:$0xff]
    %v1172 = vld [vmem:[#allocation4 + $0x68] sm:$0xff]
    %v1173 = vld [vmem:[#allocation4 + $0x70] sm:$0xff]
    %v1174 = vld [vmem:[#allocation4 + $0x78] sm:$0xff]
    %v1175 = vld [vmem:[#allocation4 + $0x80] sm:$0xff]
    %v1176 = vld [vmem:[#allocation4 + $0x88] sm:$0xff]
    %v1177 = vld [vmem:[#allocation4 + $0x90] sm:$0xff]
    %v1178 = vld [vmem:[#allocation4 + $0x98] sm:$0xff]
    %v1179 = vld [vmem:[#allocation4 + $0xa0] sm:$0xff]
    %v1180 = vld [vmem:[#allocation4 + $0xa8] sm:$0xff]
    %v1181 = vld [vmem:[#allocation4 + $0xb0] sm:$0xff]
    %v1182 = vld [vmem:[#allocation4 + $0xb8] sm:$0xff]
    %v1183 = vld [vmem:[#allocation4 + $0xc0] sm:$0xff]
    %v1184 = vld [vmem:[#allocation4 + $0xc8] sm:$0xff]
    %v1185 = vld [vmem:[#allocation4 + $0xd0] sm:$0xff]
    %v1186 = vld [vmem:[#allocation4 + $0xd8] sm:$0xff]
    %v1187 = vld [vmem:[#allocation4 + $0xe0] sm:$0xff]
    %v1188 = vld [vmem:[#allocation4 + $0xe8] sm:$0xff]
    %v1189 = vld [vmem:[#allocation4 + $0xf0] sm:$0xff]
    %v1190 = vld [vmem:[#allocation4 + $0xf8] sm:$0xff]
    %v1191 = vld [vmem:[#allocation4 + $0x100] sm:$0xff]
    %v1192 = vld [vmem:[#allocation4 + $0x108] sm:$0xff]
    %v1193 = vld [vmem:[#allocation4 + $0x110] sm:$0xff]
    %v1194 = vld [vmem:[#allocation4 + $0x118] sm:$0xff]
    %v1195 = vld [vmem:[#allocation4 + $0x120] sm:$0xff]
    %v1196 = vld [vmem:[#allocation4 + $0x128] sm:$0xff]
    %v1197 = vld [vmem:[#allocation4 + $0x130] sm:$0xff]
    %v1198 = vld [vmem:[#allocation4 + $0x138] sm:$0xff]
    %v1199 = vld [vmem:[#allocation4 + $0x140] sm:$0xff]
    %v1200 = vld [vmem:[#allocation4 + $0x148] sm:$0xff]
    %v1201 = vld [vmem:[#allocation4 + $0x150] sm:$0xff]
    %v1202 = vld [vmem:[#allocation4 + $0x158] sm:$0xff]
    %v1203 = vld [vmem:[#allocation4 + $0x160] sm:$0xff]
    %v1204 = vld [vmem:[#allocation17] sm:$0xff]
    %1206 = vset.pattern.permute.xlu0 0
    %1207 = vperm.xlu0 %1206, %v1204
    %v1208 = vpop.permute.xlu0 %1207
    %vm1210 = vcmask 588800
    %v1212 = vsel %vm1210, %v1158, 0
    %1214 = vmatprep.subr.mxu0 %v1160
    %1215 = vmatpush1.msra.mxu0 %v1159
    %1216 = vmatprep.subr.mxu0 %v1165
    %1217 = vmatpush1.msra.mxu0 %v1164
    %1218 = vmatprep.subr.mxu0 %v1170
    %1219 = vmatpush1.msra.mxu0 %v1169
    %1220 = vmatprep.subr.mxu0 %v1175
    %1221 = vmatpush1.msra.mxu0 %v1174
    %1222 = vmatprep.subr.mxu0 %v1180
    %1223 = vmatpush1.msra.mxu0 %v1179
    %1224 = vmatprep.subr.mxu0 %v1185
    %1225 = vmatpush1.msra.mxu0 %v1184
    %1226 = vmatprep.subr.mxu0 %v1190
    %1227 = vmatpush1.msra.mxu0 %v1189
    %1228 = vmatprep.subr.mxu0 %v1195
    %1229 = vmatpush1.msra.mxu0 %v1194
    %1230 = vmatprep.subr.mxu0 %v1200
    %1231 = vmatpush1.msra.mxu0 %v1199
    %1232 = vmatprep.subr.mxu0 0.0
    %1233 = vmatpush1.msra.mxu0 0.0
    %1234 = vmatprep.subr.mxu0 0.0
    %1235 = vmatpush1.msra.mxu0 0.0
    %1236 = vmatprep.subr.mxu0 0.0
    %1237 = vmatpush1.msra.mxu0 0.0
    %1238 = vmatprep.subr.mxu0 0.0
    %1239 = vmatpush1.msra.mxu0 0.0
    %1240 = vmatprep.subr.mxu0 0.0
    %1241 = vmatpush1.msra.mxu0 0.0
    %1242 = vmatprep.subr.mxu0 0.0
    %1243 = vmatpush1.msra.mxu0 0.0
    %1244 = vmatprep.subr.mxu0 0.0
    %1245 = vmatpush1.msra.mxu0 0.0
    %1246 = vmatprep.subr.mxu0 0.0
    %1247 = vmatpush1.msra.mxu0 0.0
    %1248 = vmatprep.subr.mxu0 0.0
    %1249 = vmatpush1.msra.mxu0 0.0
    %1250 = vmatprep.subr.mxu0 0.0
    %1251 = vmatpush1.msra.mxu0 0.0
    %1252 = vmatprep.subr.mxu0 0.0
    %1253 = vmatpush1.msra.mxu0 0.0
    %1254 = vmatprep.subr.mxu0 0.0
    %1255 = vmatpush1.msra.mxu0 0.0
    %1256 = vmatprep.subr.mxu0 0.0
    %1257 = vmatpush1.msra.mxu0 0.0
    %1258 = vmatprep.subr.mxu0 0.0
    %1259 = vmatpush1.msra.mxu0 0.0
    %1260 = vmatprep.subr.mxu0 0.0
    %1261 = vmatpush1.msra.mxu0 0.0
    %1262 = vmatprep.subr.mxu0 0.0
    %1263 = vmatpush1.msra.mxu0 0.0
    %1264 = vmatprep.subr.mxu0 0.0
    %1265 = vmatpush1.msra.mxu0 0.0
    %1266 = vmatprep.subr.mxu0 0.0
    %1267 = vmatpush1.msra.mxu0 0.0
    %1268 = vmatprep.subr.mxu0 0.0
    %1269 = vmatpush1.msra.mxu0 0.0
    %1270 = vmatprep.subr.mxu0 0.0
    %1271 = vmatpush1.msra.mxu0 0.0
    %1272 = vmatprep.subr.mxu0 0.0
    %1273 = vmatpush1.msra.mxu0 0.0
    %1274 = vmatprep.subr.mxu0 0.0
    %1275 = vmatpush1.msra.mxu0 0.0
    %1276 = vmatprep.subr.mxu0 0.0
    %1277 = vmatpush1.msra.mxu0 0.0
    %1278 = vmatprep.mubr.f32.mxu0 0.0
    %1279 = vmatmul.mubr.f32.gmra.mrb[0].mxu0 %v1212
    %v1280 = vpop.f32.mrb[0].mxu0
    %v1281 = vadd.f32 %v1208, %v1280
    %v1282 = vpop.f32.mrb[0].mxu0
    %v1283 = vadd.f32 %v1208, %v1282
    %1284 = vdwg.mxu0
    %1285 = vmatprep.subr.mxu0 %v1162
    %1286 = vmatpush1.msra.mxu0 %v1161
    %1287 = vmatprep.subr.mxu0 %v1167
    %1288 = vmatpush1.msra.mxu0 %v1166
    %1289 = vmatprep.subr.mxu0 %v1172
    %1290 = vmatpush1.msra.mxu0 %v1171
    %1291 = vmatprep.subr.mxu0 %v1177
    %1292 = vmatpush1.msra.mxu0 %v1176
    %1293 = vmatprep.subr.mxu0 %v1182
    %1294 = vmatpush1.msra.mxu0 %v1181
    %1295 = vmatprep.subr.mxu0 %v1187
    %1296 = vmatpush1.msra.mxu0 %v1186
    %1297 = vmatprep.subr.mxu0 %v1192
    %1298 = vmatpush1.msra.mxu0 %v1191
    %1299 = vmatprep.subr.mxu0 %v1197
    %1300 = vmatpush1.msra.mxu0 %v1196
    %1301 = vmatprep.subr.mxu0 %v1202
    %1302 = vmatpush1.msra.mxu0 %v1201
    %1303 = vmatprep.subr.mxu0 0.0
    %1304 = vmatpush1.msra.mxu0 0.0
    %1305 = vmatprep.subr.mxu0 0.0
    %1306 = vmatpush1.msra.mxu0 0.0
    %1307 = vmatprep.subr.mxu0 0.0
    %1308 = vmatpush1.msra.mxu0 0.0
    %1309 = vmatprep.subr.mxu0 0.0
    %1310 = vmatpush1.msra.mxu0 0.0
    %1311 = vmatprep.subr.mxu0 0.0
    %1312 = vmatpush1.msra.mxu0 0.0
    %1313 = vmatprep.subr.mxu0 0.0
    %1314 = vmatpush1.msra.mxu0 0.0
    %1315 = vmatprep.subr.mxu0 0.0
    %1316 = vmatpush1.msra.mxu0 0.0
    %1317 = vmatprep.subr.mxu0 0.0
    %1318 = vmatpush1.msra.mxu0 0.0
    %1319 = vmatprep.subr.mxu0 0.0
    %1320 = vmatpush1.msra.mxu0 0.0
    %1321 = vmatprep.subr.mxu0 0.0
    %1322 = vmatpush1.msra.mxu0 0.0
    %1323 = vmatprep.subr.mxu0 0.0
    %1324 = vmatpush1.msra.mxu0 0.0
    %1325 = vmatprep.subr.mxu0 0.0
    %1326 = vmatpush1.msra.mxu0 0.0
    %1327 = vmatprep.subr.mxu0 0.0
    %1328 = vmatpush1.msra.mxu0 0.0
    %1329 = vmatprep.subr.mxu0 0.0
    %1330 = vmatpush1.msra.mxu0 0.0
    %1331 = vmatprep.subr.mxu0 0.0
    %1332 = vmatpush1.msra.mxu0 0.0
    %1333 = vmatprep.subr.mxu0 0.0
    %1334 = vmatpush1.msra.mxu0 0.0
    %1335 = vmatprep.subr.mxu0 0.0
    %1336 = vmatpush1.msra.mxu0 0.0
    %1337 = vmatprep.subr.mxu0 0.0
    %1338 = vmatpush1.msra.mxu0 0.0
    %1339 = vmatprep.subr.mxu0 0.0
    %1340 = vmatpush1.msra.mxu0 0.0
    %1341 = vmatprep.subr.mxu0 0.0
    %1342 = vmatpush1.msra.mxu0 0.0
    %1343 = vmatprep.subr.mxu0 0.0
    %1344 = vmatpush1.msra.mxu0 0.0
    %1345 = vmatprep.subr.mxu0 0.0
    %1346 = vmatpush1.msra.mxu0 0.0
    %1347 = vmatprep.subr.mxu0 0.0
    %1348 = vmatpush1.msra.mxu0 0.0
    %1349 = vmatprep.mubr.f32.mxu0 0.0
    %1350 = vmatmul.mubr.f32.gmra.mrb[0].mxu0 %v1212
    %v1351 = vpop.f32.mrb[0].mxu0
    %v1352 = vadd.f32 %v1208, %v1351
    %v1353 = vpop.f32.mrb[0].mxu0
    %v1354 = vadd.f32 %v1208, %v1353
    %1355 = vdwg.mxu0
    %1356 = vmatprep.subr.mxu0 0.0
    %1357 = vmatpush1.msra.mxu0 %v1163
    %1358 = vmatprep.subr.mxu0 0.0
    %1359 = vmatpush1.msra.mxu0 %v1168
    %1360 = vmatprep.subr.mxu0 0.0
    %1361 = vmatpush1.msra.mxu0 %v1173
    %1362 = vmatprep.subr.mxu0 0.0
    %1363 = vmatpush1.msra.mxu0 %v1178
    %1364 = vmatprep.subr.mxu0 0.0
    %1365 = vmatpush1.msra.mxu0 %v1183
    %1366 = vmatprep.subr.mxu0 0.0
    %1367 = vmatpush1.msra.mxu0 %v1188
    %1368 = vmatprep.subr.mxu0 0.0
    %1369 = vmatpush1.msra.mxu0 %v1193
    %1370 = vmatprep.subr.mxu0 0.0
    %1371 = vmatpush1.msra.mxu0 %v1198
    %1372 = vmatprep.subr.mxu0 0.0
    %1373 = vmatpush1.msra.mxu0 %v1203
    %1374 = vmatprep.subr.mxu0 0.0
    %1375 = vmatpush1.msra.mxu0 0.0
    %1376 = vmatprep.subr.mxu0 0.0
    %1377 = vmatpush1.msra.mxu0 0.0
    %1378 = vmatprep.subr.mxu0 0.0
    %1379 = vmatpush1.msra.mxu0 0.0
    %1380 = vmatprep.subr.mxu0 0.0
    %1381 = vmatpush1.msra.mxu0 0.0
    %1382 = vmatprep.subr.mxu0 0.0
    %1383 = vmatpush1.msra.mxu0 0.0
    %1384 = vmatprep.subr.mxu0 0.0
    %1385 = vmatpush1.msra.mxu0 0.0
    %1386 = vmatprep.subr.mxu0 0.0
    %1387 = vmatpush1.msra.mxu0 0.0
    %1388 = vmatprep.subr.mxu0 0.0
    %1389 = vmatpush1.msra.mxu0 0.0
    %1390 = vmatprep.subr.mxu0 0.0
    %1391 = vmatpush1.msra.mxu0 0.0
    %1392 = vmatprep.subr.mxu0 0.0
    %1393 = vmatpush1.msra.mxu0 0.0
    %1394 = vmatprep.subr.mxu0 0.0
    %1395 = vmatpush1.msra.mxu0 0.0
    %1396 = vmatprep.subr.mxu0 0.0
    %1397 = vmatpush1.msra.mxu0 0.0
    %1398 = vmatprep.subr.mxu0 0.0
    %1399 = vmatpush1.msra.mxu0 0.0
    %1400 = vmatprep.subr.mxu0 0.0
    %1401 = vmatpush1.msra.mxu0 0.0
    %1402 = vmatprep.subr.mxu0 0.0
    %1403 = vmatpush1.msra.mxu0 0.0
    %1404 = vmatprep.subr.mxu0 0.0
    %1405 = vmatpush1.msra.mxu0 0.0
    %1406 = vmatprep.subr.mxu0 0.0
    %1407 = vmatpush1.msra.mxu0 0.0
    %1408 = vmatprep.subr.mxu0 0.0
    %1409 = vmatpush1.msra.mxu0 0.0
    %1410 = vmatprep.subr.mxu0 0.0
    %1411 = vmatpush1.msra.mxu0 0.0
    %1412 = vmatprep.subr.mxu0 0.0
    %1413 = vmatpush1.msra.mxu0 0.0
    %1414 = vmatprep.subr.mxu0 0.0
    %1415 = vmatpush1.msra.mxu0 0.0
    %1416 = vmatprep.subr.mxu0 0.0
    %1417 = vmatpush1.msra.mxu0 0.0
    %1418 = vmatprep.subr.mxu0 0.0
    %1419 = vmatpush1.msra.mxu0 0.0
    %1420 = vmatprep.mubr.f32.mxu0 0.0
    %1421 = vmatmul.mubr.f32.gmra.mrb[0].mxu0 %v1212
    %v1422 = vpop.f32.mrb[0].mxu0
    %v1423 = vadd.f32 %v1208, %v1422
    %v1424 = vpop.f32.mrb[0].mxu0
    %1425 = vdwg.mxu0
    %v1426 = vmul.f32 %v1281, %v716
    %v1427 = vmul.f32 %v1283, %v720
    %v1428 = vmul.f32 %v1352, %v724
    %v1429 = vmul.f32 %v1354, %v728
    %v1430 = vmul.f32 %v1423, %v732
    %v1431 = vadd.f32 %v1426, %v1427
    %v1432 = vadd.f32 %v1431, %v1428
    %v1433 = vadd.f32 %v1432, %v1429
    %v1434 = vsel %vm746, %v1430, 0.0
    %v1435 = vadd.f32 %v1433, %v1434
    %1436 = vadd.xlane.f32.xlu0 %v1435
    %v1437 = vpop.xlane.xlu0 %1436
    %v1438 = vmul.f32 %v1437, 0.001953125
    %v1439 = vsub.f32 %v1281, %v1438
    %v1440 = vsub.f32 %v1283, %v1438
    %v1441 = vsub.f32 %v1352, %v1438
    %v1442 = vsub.f32 %v1354, %v1438
    %v1443 = vsub.f32 %v1423, %v1438
    %v1444 = vmul.f32 %v1439, %v716
    %v1445 = vmul.f32 %v1440, %v720
    %v1446 = vmul.f32 %v1441, %v724
    %v1447 = vmul.f32 %v1442, %v728
    %v1448 = vmul.f32 %v1443, %v732
    %v1449 = vmul.f32 %v1444, %v1444
    %v1450 = vmul.f32 %v1445, %v1445
    %v1451 = vmul.f32 %v1446, %v1446
    %v1452 = vmul.f32 %v1447, %v1447
    %v1453 = vmul.f32 %v1448, %v1448
    %v1454 = vadd.f32 %v1449, %v1450
    %v1455 = vadd.f32 %v1454, %v1451
    %v1456 = vadd.f32 %v1455, %v1452
    %v1457 = vsel %vm746, %v1453, 0.0
    %v1458 = vadd.f32 %v1456, %v1457
    %1459 = vadd.xlane.f32.xlu0 %v1458
    %v1460 = vpop.xlane.xlu0 %1459
    %v1461 = vmul.f32 %v1460, 0.001953125
    %v1462 = vld [vmem:[#allocation19] sm:$0xff]
    %v1463 = vadd.f32 %v1461, 1e-05
    %v1464 = vrsqrt.pop %v1463
    %v1465 = vmul.f32 %v1462, %v1464
    %v1466 = vld [vmem:[#allocation20] sm:$0xff]
    %v1467 = vmul.f32 %v1438, %v1465
    %v1468 = vsub.f32 %v1466, %v1467
    %1470 = vset.pattern.permute.xlu0 0
    %1471 = vperm.xlu0 %1470, %v1465
    %v1472 = vpop.permute.xlu0 %1471
    %v1474 = vmul.f32 %v1281, %v1472
    %v1475 = vmul.f32 %v1283, %v1472
    %v1476 = vmul.f32 %v1352, %v1472
    %v1477 = vmul.f32 %v1354, %v1472
    %v1478 = vmul.f32 %v1423, %v1472
    %1480 = vset.pattern.permute.xlu0 0
    %1481 = vperm.xlu0 %1480, %v1468
    %v1482 = vpop.permute.xlu0 %1481
    %v1484 = vadd.f32 %v1474, %v1482
    %v1485 = vadd.f32 %v1475, %v1482
    %v1486 = vadd.f32 %v1476, %v1482
    %v1487 = vadd.f32 %v1477, %v1482
    %v1488 = vadd.f32 %v1478, %v1482
    %vm1489 = vcmp.ge.f32.partialorder %v1484, 0.0
    %vm1490 = vcmp.ge.f32.partialorder %v1485, 0.0
    %vm1491 = vcmp.ge.f32.partialorder %v1486, 0.0
    %vm1492 = vcmp.ge.f32.partialorder %v1487, 0.0
    %vm1493 = vcmp.ge.f32.partialorder %v1488, 0.0
    %v1494 = vmul.f32 %v1484, 0.8
    %v1495 = vmul.f32 %v1485, 0.8
    %v1496 = vmul.f32 %v1486, 0.8
    %v1497 = vmul.f32 %v1487, 0.8
    %v1498 = vmul.f32 %v1488, 0.8
    %v1499 = vsel %vm1489, %v1484, %v1494
    %v1500 = vsel %vm1490, %v1485, %v1495
    %v1501 = vsel %vm1491, %v1486, %v1496
    %v1502 = vsel %vm1492, %v1487, %v1497
    %v1503 = vsel %vm1493, %v1488, %v1498
    %1509 = vrot.lane.b32.xlu0 %v1499, 127
    %v1510 = vpop.permute.xlu0 %1509
    %1511 = vrot.lane.b32.xlu0 %v1500, 127
    %v1512 = vpop.permute.xlu0 %1511
    %1513 = vrot.lane.b32.xlu0 %v1501, 127
    %v1514 = vpop.permute.xlu0 %1513
    %1515 = vrot.lane.b32.xlu0 %v1502, 127
    %v1516 = vpop.permute.xlu0 %1515
    %1517 = vrot.lane.b32.xlu0 %v1503, 127
    %v1518 = vpop.permute.xlu0 %1517
    %v1519 = vsel %vm187, %v1510, %v1512
    %v1520 = vsel %vm187, %v1512, %v1514
    %v1521 = vsel %vm187, %v1514, %v1516
    %v1522 = vsel %vm187, %v1516, %v1518
    %v1528 = vmax.f32 %v1499, %v1519
    %v1529 = vmax.f32 %v1500, %v1520
    %v1530 = vmax.f32 %v1501, %v1521
    %v1531 = vmax.f32 %v1502, %v1522
    %v1532 = vmax.f32 %v1503, %v1518
    %1533 = vrot.lane.b32.xlu0 %v1499, 126
    %v1534 = vpop.permute.xlu0 %1533
    %1535 = vrot.lane.b32.xlu0 %v1500, 126
    %v1536 = vpop.permute.xlu0 %1535
    %1537 = vrot.lane.b32.xlu0 %v1501, 126
    %v1538 = vpop.permute.xlu0 %1537
    %1539 = vrot.lane.b32.xlu0 %v1502, 126
    %v1540 = vpop.permute.xlu0 %1539
    %1541 = vrot.lane.b32.xlu0 %v1503, 126
    %v1542 = vpop.permute.xlu0 %1541
    %v1543 = vsel %vm221, %v1534, %v1536
    %v1544 = vsel %vm221, %v1536, %v1538
    %v1545 = vsel %vm221, %v1538, %v1540
    %v1546 = vsel %vm221, %v1540, %v1542
    %v1552 = vmax.f32 %v1528, %v1543
    %v1553 = vmax.f32 %v1529, %v1544
    %v1554 = vmax.f32 %v1530, %v1545
    %v1555 = vmax.f32 %v1531, %v1546
    %v1556 = vmax.f32 %v1532, %v1542
    %1557 = vrot.lane.b32.xlu0 %v1499, 125
    %v1558 = vpop.permute.xlu0 %1557
    %1559 = vrot.lane.b32.xlu0 %v1500, 125
    %v1560 = vpop.permute.xlu0 %1559
    %1561 = vrot.lane.b32.xlu0 %v1501, 125
    %v1562 = vpop.permute.xlu0 %1561
    %1563 = vrot.lane.b32.xlu0 %v1502, 125
    %v1564 = vpop.permute.xlu0 %1563
    %1565 = vrot.lane.b32.xlu0 %v1503, 125
    %v1566 = vpop.permute.xlu0 %1565
    %vm1567 = vcmask 1022976
    %v1568 = vsel %vm1567, %v1558, %v1560
    %v1569 = vsel %vm1567, %v1560, %v1562
    %v1570 = vsel %vm1567, %v1562, %v1564
    %v1571 = vsel %vm1567, %v1564, %v1566
    %v1577 = vmax.f32 %v1552, %v1568
    %v1578 = vmax.f32 %v1553, %v1569
    %v1579 = vmax.f32 %v1554, %v1570
    %v1580 = vmax.f32 %v1555, %v1571
    %v1581 = vmax.f32 %v1556, %v1566
    %1582 = vrot.lane.b32.xlu0 %v1499, 124
    %v1583 = vpop.permute.xlu0 %1582
    %1584 = vrot.lane.b32.xlu0 %v1500, 124
    %v1585 = vpop.permute.xlu0 %1584
    %1586 = vrot.lane.b32.xlu0 %v1501, 124
    %v1587 = vpop.permute.xlu0 %1586
    %1588 = vrot.lane.b32.xlu0 %v1502, 124
    %v1589 = vpop.permute.xlu0 %1588
    %1590 = vrot.lane.b32.xlu0 %v1503, 124
    %v1591 = vpop.permute.xlu0 %1590
    %vm1592 = vcmask 1014784
    %v1593 = vsel %vm1592, %v1583, %v1585
    %v1594 = vsel %vm1592, %v1585, %v1587
    %v1595 = vsel %vm1592, %v1587, %v1589
    %v1596 = vsel %vm1592, %v1589, %v1591
    %v1602 = vmax.f32 %v1577, %v1593
    %v1603 = vmax.f32 %v1578, %v1594
    %v1604 = vmax.f32 %v1579, %v1595
    %v1605 = vmax.f32 %v1580, %v1596
    %v1606 = vmax.f32 %v1581, %v1591
    %1607 = vrot.lane.b32.xlu0 %v1499, 123
    %v1608 = vpop.permute.xlu0 %1607
    %1609 = vrot.lane.b32.xlu0 %v1500, 123
    %v1610 = vpop.permute.xlu0 %1609
    %1611 = vrot.lane.b32.xlu0 %v1501, 123
    %v1612 = vpop.permute.xlu0 %1611
    %1613 = vrot.lane.b32.xlu0 %v1502, 123
    %v1614 = vpop.permute.xlu0 %1613
    %1615 = vrot.lane.b32.xlu0 %v1503, 123
    %v1616 = vpop.permute.xlu0 %1615
    %vm1617 = vcmask 1006592
    %v1618 = vsel %vm1617, %v1608, %v1610
    %v1619 = vsel %vm1617, %v1610, %v1612
    %v1620 = vsel %vm1617, %v1612, %v1614
    %v1621 = vsel %vm1617, %v1614, %v1616
    %v1627 = vmax.f32 %v1602, %v1618
    %v1628 = vmax.f32 %v1603, %v1619
    %v1629 = vmax.f32 %v1604, %v1620
    %v1630 = vmax.f32 %v1605, %v1621
    %v1631 = vmax.f32 %v1606, %v1616
    %1632 = vrot.lane.b32.xlu0 %v1499, 122
    %v1633 = vpop.permute.xlu0 %1632
    %1634 = vrot.lane.b32.xlu0 %v1500, 122
    %v1635 = vpop.permute.xlu0 %1634
    %1636 = vrot.lane.b32.xlu0 %v1501, 122
    %v1637 = vpop.permute.xlu0 %1636
    %1638 = vrot.lane.b32.xlu0 %v1502, 122
    %v1639 = vpop.permute.xlu0 %1638
    %1640 = vrot.lane.b32.xlu0 %v1503, 122
    %v1641 = vpop.permute.xlu0 %1640
    %vm1642 = vcmask 998400
    %v1643 = vsel %vm1642, %v1633, %v1635
    %v1644 = vsel %vm1642, %v1635, %v1637
    %v1645 = vsel %vm1642, %v1637, %v1639
    %v1646 = vsel %vm1642, %v1639, %v1641
    %v1652 = vmax.f32 %v1627, %v1643
    %v1653 = vmax.f32 %v1628, %v1644
    %v1654 = vmax.f32 %v1629, %v1645
    %v1655 = vmax.f32 %v1630, %v1646
    %v1656 = vmax.f32 %v1631, %v1641
    %1657 = vrot.lane.b32.xlu0 %v1499, 121
    %v1658 = vpop.permute.xlu0 %1657
    %1659 = vrot.lane.b32.xlu0 %v1500, 121
    %v1660 = vpop.permute.xlu0 %1659
    %1661 = vrot.lane.b32.xlu0 %v1501, 121
    %v1662 = vpop.permute.xlu0 %1661
    %1663 = vrot.lane.b32.xlu0 %v1502, 121
    %v1664 = vpop.permute.xlu0 %1663
    %1665 = vrot.lane.b32.xlu0 %v1503, 121
    %v1666 = vpop.permute.xlu0 %1665
    %vm1667 = vcmask 990208
    %v1668 = vsel %vm1667, %v1658, %v1660
    %v1669 = vsel %vm1667, %v1660, %v1662
    %v1670 = vsel %vm1667, %v1662, %v1664
    %v1671 = vsel %vm1667, %v1664, %v1666
    %v1677 = vmax.f32 %v1652, %v1668
    %v1678 = vmax.f32 %v1653, %v1669
    %v1679 = vmax.f32 %v1654, %v1670
    %v1680 = vmax.f32 %v1655, %v1671
    %v1681 = vmax.f32 %v1656, %v1666
    %1686 = vrot.lane.b32.xlu0 %v1677, 110
    %v1687 = vpop.permute.xlu0 %1686
    %1688 = vrot.lane.b32.xlu0 %v1678, 110
    %v1689 = vpop.permute.xlu0 %1688
    %1690 = vrot.lane.b32.xlu0 %v1679, 110
    %v1691 = vpop.permute.xlu0 %1690
    %1692 = vrot.lane.b32.xlu0 %v1680, 110
    %v1693 = vpop.permute.xlu0 %1692
    %v1694 = vsel %vm255, %v1687, %v1689
    %v1695 = vsel %vm255, %v1689, %v1691
    %v1696 = vsel %vm255, %v1691, %v1693
    %v1701 = vmax.f32 %v1677, %v1694
    %v1702 = vmax.f32 %v1678, %v1695
    %v1703 = vmax.f32 %v1679, %v1696
    %v1704 = vmax.f32 %v1680, %v1693
    %1706 = vrot.lane.b32.xlu0 %v1677, 92
    %v1707 = vpop.permute.xlu0 %1706
    %1708 = vrot.lane.b32.xlu0 %v1678, 92
    %v1709 = vpop.permute.xlu0 %1708
    %1710 = vrot.lane.b32.xlu0 %v1679, 92
    %v1711 = vpop.permute.xlu0 %1710
    %1712 = vrot.lane.b32.xlu0 %v1680, 92
    %v1713 = vpop.permute.xlu0 %1712
    %1714 = vrot.lane.b32.xlu0 %v1681, 92
    %v1715 = vpop.permute.xlu0 %1714
    %v1716 = vsel %vm358, %v1707, %v1709
    %v1717 = vsel %vm358, %v1709, %v1711
    %v1718 = vsel %vm358, %v1711, %v1713
    %v1719 = vsel %vm358, %v1713, %v1715
    %v1724 = vmax.f32 %v1701, %v1716
    %v1725 = vmax.f32 %v1702, %v1717
    %v1726 = vmax.f32 %v1703, %v1718
    %v1727 = vmax.f32 %v1704, %v1719
    %1728 = vrot.lane.b32.xlu0 %v1677, 74
    %v1729 = vpop.permute.xlu0 %1728
    %1730 = vrot.lane.b32.xlu0 %v1678, 74
    %v1731 = vpop.permute.xlu0 %1730
    %1732 = vrot.lane.b32.xlu0 %v1679, 74
    %v1733 = vpop.permute.xlu0 %1732
    %1734 = vrot.lane.b32.xlu0 %v1680, 74
    %v1735 = vpop.permute.xlu0 %1734
    %1736 = vrot.lane.b32.xlu0 %v1681, 74
    %v1737 = vpop.permute.xlu0 %1736
    %vm1738 = vcmask 605184
    %v1739 = vsel %vm1738, %v1729, %v1731
    %v1740 = vsel %vm1738, %v1731, %v1733
    %v1741 = vsel %vm1738, %v1733, %v1735
    %v1742 = vsel %vm1738, %v1735, %v1737
    %v1747 = vmax.f32 %v1724, %v1739
    %v1748 = vmax.f32 %v1725, %v1740
    %v1749 = vmax.f32 %v1726, %v1741
    %v1750 = vmax.f32 %v1727, %v1742
    %1751 = vrot.lane.b32.xlu0 %v1677, 56
    %v1752 = vpop.permute.xlu0 %1751
    %1753 = vrot.lane.b32.xlu0 %v1678, 56
    %v1754 = vpop.permute.xlu0 %1753
    %1755 = vrot.lane.b32.xlu0 %v1679, 56
    %v1756 = vpop.permute.xlu0 %1755
    %1757 = vrot.lane.b32.xlu0 %v1680, 56
    %v1758 = vpop.permute.xlu0 %1757
    %1759 = vrot.lane.b32.xlu0 %v1681, 56
    %v1760 = vpop.permute.xlu0 %1759
    %vm1761 = vcmask 457728
    %v1762 = vsel %vm1761, %v1752, %v1754
    %v1763 = vsel %vm1761, %v1754, %v1756
    %v1764 = vsel %vm1761, %v1756, %v1758
    %v1765 = vsel %vm1761, %v1758, %v1760
    %v1770 = vmax.f32 %v1747, %v1762
    %v1771 = vmax.f32 %v1748, %v1763
    %v1772 = vmax.f32 %v1749, %v1764
    %v1773 = vmax.f32 %v1750, %v1765
    %1774 = vrot.lane.b32.xlu0 %v1677, 38
    %v1775 = vpop.permute.xlu0 %1774
    %1776 = vrot.lane.b32.xlu0 %v1678, 38
    %v1777 = vpop.permute.xlu0 %1776
    %1778 = vrot.lane.b32.xlu0 %v1679, 38
    %v1779 = vpop.permute.xlu0 %1778
    %1780 = vrot.lane.b32.xlu0 %v1680, 38
    %v1781 = vpop.permute.xlu0 %1780
    %1782 = vrot.lane.b32.xlu0 %v1681, 38
    %v1783 = vpop.permute.xlu0 %1782
    %vm1784 = vcmask 310272
    %v1785 = vsel %vm1784, %v1775, %v1777
    %v1786 = vsel %vm1784, %v1777, %v1779
    %v1787 = vsel %vm1784, %v1779, %v1781
    %v1788 = vsel %vm1784, %v1781, %v1783
    %v1793 = vmax.f32 %v1770, %v1785
    %v1794 = vmax.f32 %v1771, %v1786
    %v1795 = vmax.f32 %v1772, %v1787
    %v1796 = vmax.f32 %v1773, %v1788
    %1797 = vrot.lane.b32.xlu0 %v1677, 20
    %v1798 = vpop.permute.xlu0 %1797
    %1799 = vrot.lane.b32.xlu0 %v1678, 20
    %v1800 = vpop.permute.xlu0 %1799
    %1801 = vrot.lane.b32.xlu0 %v1679, 20
    %v1802 = vpop.permute.xlu0 %1801
    %1803 = vrot.lane.b32.xlu0 %v1680, 20
    %v1804 = vpop.permute.xlu0 %1803
    %1805 = vrot.lane.b32.xlu0 %v1681, 20
    %v1806 = vpop.permute.xlu0 %1805
    %vm1807 = vcmask 162816
    %v1808 = vsel %vm1807, %v1798, %v1800
    %v1809 = vsel %vm1807, %v1800, %v1802
    %v1810 = vsel %vm1807, %v1802, %v1804
    %v1811 = vsel %vm1807, %v1804, %v1806
    %v1816 = vmax.f32 %v1793, %v1808
    %v1817 = vmax.f32 %v1794, %v1809
    %v1818 = vmax.f32 %v1795, %v1810
    %v1819 = vmax.f32 %v1796, %v1811
    %1820 = vrot.lane.b32.xlu0 %v1677, 2
    %v1821 = vpop.permute.xlu0 %1820
    %1822 = vrot.lane.b32.xlu0 %v1678, 2
    %v1823 = vpop.permute.xlu0 %1822
    %1824 = vrot.lane.b32.xlu0 %v1679, 2
    %v1825 = vpop.permute.xlu0 %1824
    %1826 = vrot.lane.b32.xlu0 %v1680, 2
    %v1827 = vpop.permute.xlu0 %1826
    %1828 = vrot.lane.b32.xlu0 %v1681, 2
    %v1829 = vpop.permute.xlu0 %1828
    %vm1830 = vcmask 15360
    %v1831 = vsel %vm1830, %v1821, %v1823
    %v1832 = vsel %vm1830, %v1823, %v1825
    %v1833 = vsel %vm1830, %v1825, %v1827
    %v1834 = vsel %vm1830, %v1827, %v1829
    %v1839 = vmax.f32 %v1816, %v1831
    %v1840 = vmax.f32 %v1817, %v1832
    %v1841 = vmax.f32 %v1818, %v1833
    %v1842 = vmax.f32 %v1819, %v1834
    %v1843 = vlaneseq
    %v1844 = vshrl.u32 %v1843, 7
    %v1845 = vadd.s32 %v1844, 8
    %v1846 = vlaneseq
    %v1847 = vand.u32 %v1846, 127
    %v1848 = vmul.u32 %v1847, 8
    %vm1849 = vcmp.eq.s32.totalorder %v1844, %v1848
    %vm1850 = vcmp.eq.s32.totalorder %v1845, %v1848
    %v1851 = vsel %vm1849, 1, 0
    %v1852 = vsel %vm1850, 1, 0
    %v1853 = vcvt.s32.f32 %v1851
    %v1854 = vcvt.s32.f32 %v1852
    %1856 = vrot.lane.b32.xlu0 %v1840, 112
    %v1857 = vpop.permute.xlu0 %1856
    %1859 = vrot.lane.b32.xlu0 %v1841, 60
    %v1860 = vpop.permute.xlu0 %1859
    %1862 = vrot.lane.b32.xlu0 %v1842, 44
    %v1863 = vpop.permute.xlu0 %1862
    %vm1864 = vcmask 72704
    %v1866 = vsel %vm1864, %v1839, 0
    %v1868 = vsel %vm1864, %v1857, 0
    %v1870 = vsel %vm1864, %v1860, 0
    %v1872 = vsel %vm1864, %v1863, 0
    %vm1874 = vcmask 1040384
    %v1876 = vsel %vm1874, %v1854, 0
    %1878 = vmatprep.subr.mxu0 0.0
    %1879 = vmatpush1.msra.mxu0 %v1853
    %1880 = vmatprep.subr.mxu0 0.0
    %1881 = vmatpush1.msra.mxu0 %v1876
    %1882 = vmatprep.subr.mxu0 0.0
    %1883 = vmatpush1.msra.mxu0 0.0
    %1884 = vmatprep.subr.mxu0 0.0
    %1885 = vmatpush1.msra.mxu0 0.0
    %1886 = vmatprep.subr.mxu0 0.0
    %1887 = vmatpush1.msra.mxu0 0.0
    %1888 = vmatprep.subr.mxu0 0.0
    %1889 = vmatpush1.msra.mxu0 0.0
    %1890 = vmatprep.subr.mxu0 0.0
    %1891 = vmatpush1.msra.mxu0 0.0
    %1892 = vmatprep.subr.mxu0 0.0
    %1893 = vmatpush1.msra.mxu0 0.0
    %1894 = vmatprep.subr.mxu0 0.0
    %1895 = vmatpush1.msra.mxu0 0.0
    %1896 = vmatprep.subr.mxu0 0.0
    %1897 = vmatpush1.msra.mxu0 0.0
    %1898 = vmatprep.subr.mxu0 0.0
    %1899 = vmatpush1.msra.mxu0 0.0
    %1900 = vmatprep.subr.mxu0 0.0
    %1901 = vmatpush1.msra.mxu0 0.0
    %1902 = vmatprep.subr.mxu0 0.0
    %1903 = vmatpush1.msra.mxu0 0.0
    %1904 = vmatprep.subr.mxu0 0.0
    %1905 = vmatpush1.msra.mxu0 0.0
    %1906 = vmatprep.subr.mxu0 0.0
    %1907 = vmatpush1.msra.mxu0 0.0
    %1908 = vmatprep.subr.mxu0 0.0
    %1909 = vmatpush1.msra.mxu0 0.0
    %1910 = vmatprep.subr.mxu0 0.0
    %1911 = vmatpush1.msra.mxu0 0.0
    %1912 = vmatprep.subr.mxu0 0.0
    %1913 = vmatpush1.msra.mxu0 0.0
    %1914 = vmatprep.subr.mxu0 0.0
    %1915 = vmatpush1.msra.mxu0 0.0
    %1916 = vmatprep.subr.mxu0 0.0
    %1917 = vmatpush1.msra.mxu0 0.0
    %1918 = vmatprep.subr.mxu0 0.0
    %1919 = vmatpush1.msra.mxu0 0.0
    %1920 = vmatprep.subr.mxu0 0.0
    %1921 = vmatpush1.msra.mxu0 0.0
    %1922 = vmatprep.subr.mxu0 0.0
    %1923 = vmatpush1.msra.mxu0 0.0
    %1924 = vmatprep.subr.mxu0 0.0
    %1925 = vmatpush1.msra.mxu0 0.0
    %1926 = vmatprep.subr.mxu0 0.0
    %1927 = vmatpush1.msra.mxu0 0.0
    %1928 = vmatprep.subr.mxu0 0.0
    %1929 = vmatpush1.msra.mxu0 0.0
    %1930 = vmatprep.subr.mxu0 0.0
    %1931 = vmatpush1.msra.mxu0 0.0
    %1932 = vmatprep.subr.mxu0 0.0
    %1933 = vmatpush1.msra.mxu0 0.0
    %1934 = vmatprep.subr.mxu0 0.0
    %1935 = vmatpush1.msra.mxu0 0.0
    %1936 = vmatprep.subr.mxu0 0.0
    %1937 = vmatpush1.msra.mxu0 0.0
    %1938 = vmatprep.subr.mxu0 0.0
    %1939 = vmatpush1.msra.mxu0 0.0
    %1940 = vmatprep.subr.mxu0 0.0
    %1941 = vmatpush1.msra.mxu0 0.0
    %1942 = vmatprep.mubr.f32.mxu0 0.0
    %1943 = vmatmul.mubr.f32.gmra.mrb[0].mxu0 %v1866
    %v1944 = vpop.f32.mrb[0].mxu0
    %v1945 = vadd.f32 0.0, %v1944
    %v1946 = vpop.f32.mrb[0].mxu0
    %1947 = vmatprep.mubr.f32.mxu0 0.0
    %1948 = vmatmul.mubr.f32.gmra.mrb[0].mxu0 %v1868
    %v1949 = vpop.f32.mrb[0].mxu0
    %v1950 = vadd.f32 0.0, %v1949
    %v1951 = vpop.f32.mrb[0].mxu0
    %1952 = vmatprep.mubr.f32.mxu0 0.0
    %1953 = vmatmul.mubr.f32.gmra.mrb[0].mxu0 %v1870
    %v1954 = vpop.f32.mrb[0].mxu0
    %v1955 = vadd.f32 0.0, %v1954
    %v1956 = vpop.f32.mrb[0].mxu0
    %1957 = vmatprep.mubr.f32.mxu0 0.0
    %1958 = vmatmul.mubr.f32.gmra.mrb[0].mxu0 %v1872
    %v1959 = vpop.f32.mrb[0].mxu0
    %v1960 = vadd.f32 0.0, %v1959
    %v1961 = vpop.f32.mrb[0].mxu0
    %1962 = vdwg.mxu0
    %1963 = vst.msk [vmem:[#allocation22] sm:$0xff] %vm1830, %v1945
    %1964 = vst.msk [vmem:[#allocation22 + $0x8] sm:$0xff] %vm1830, %v1950
    %1965 = vst.msk [vmem:[#allocation22 + $0x10] sm:$0xff] %vm1830, %v1955
    %1966 = vst.msk [vmem:[#allocation22 + $0x18] sm:$0xff] %vm1830, %v1960
    // Predicated region
    $region82: #{tpu_custom_call.1} parent=1 // pred_check
      _
    $region83: #{tpu_custom_call.1} parent=1 // pred_check_branch
      %1968 = sbr.rel (0) target = $region85
    $region84: #{tpu_custom_call.1} parent=1 // pred_region
      %s1970 = ssub.s32 512, 512
      %1971 = vsyncadd [#allocation7], %s1970
      %s1972 = sshll.u32 [#allocation22], 4
      %s1973 = int_to_ptr.vmem [resolvable:$true] %s1972
      %1978 = dma.vmem_to_hbm [thread:$0]  %s1973, 512, %s10, [#allocation7], 128, 128, 8
    $region85: #{tpu_custom_call.1} parent=1 // pred_fallthru
      _
    // Predicated region
    $region86: #{tpu_custom_call.1} parent=1 // pred_check
      _
    $region87: #{tpu_custom_call.1} parent=1 // pred_check_branch
      %1980 = sbr.rel (0) target = $region89
    $region88: #{tpu_custom_call.1} parent=1 // pred_region
      %1981 = dma.done [#allocation7], 512
    $region89: #{tpu_custom_call.1} parent=1 // pred_fallthru
      _
    %1982 = vsyncpa [#allocation6], 1
    %1983 = vsyncpa [#allocation9], 1
    %1984 = vsyncpa [#allocation12], 1
    %1985 = vsyncpa [#allocation15], 1
    %1986 = vsyncpa [#allocation18], 1
    %1987 = vsyncpa [#allocation21], 1
    %1988 = vsyncpa [#allocation7], 1

</llo_original>
